<compile_context>
chip_gen: v5e
topology: v5e:2x2
jax: 0.10.0
libtpu: 0.0.40
codegen_flags: <defaults>
</compile_context>

<pallas_src>
import functools

import jax
import jax.numpy as jnp
from jax.experimental import pallas as pl
from jax.experimental.pallas import tpu as pltpu

_BN_EPS = 1e-5
_LANE = 128
_VMEM_LIMIT = 32 * 1024 * 1024   # safe scoped-VMEM budget on v5e/v6e/v7x


def _round_up(v, m):
    return ((v + m - 1) // m) * m


def _mish(z):
    # mish(x) = x * tanh(softplus(x)) = x * (e^{2x} + 2e^x) / (e^{2x} + 2e^x + 2)
    # One transcendental (a single exp); the divide is replaced by an EUP
    # approx reciprocal (free slot in this epilogue).  The clamp keeps e^{2x}
    # finite (for x >= 20 the ratio is 1.0 to f32 precision anyway).
    t = jnp.exp(jnp.minimum(z, 20.0))
    num = t * (t + 2.0)
    return z * (num * pl.reciprocal(num + 2.0, approx=True))


# ----------------------------- Pallas kernels ------------------------------ #

def _matmul_stats_kernel(p_ref, w_ref, y_ref, sum_ref, sq_ref, *, m_total, tm):
    """Pass 1: y = p @ w (bf16 in, f32 acc).  Emits y (bf16) plus this tile's
    per-channel sum / sum-of-squares partials (rows past the true row count
    are masked so the tail tile contributes nothing)."""
    i = pl.program_id(0)
    y = jnp.dot(p_ref[...], w_ref[...], preferred_element_type=jnp.float32)
    y_ref[...] = y.astype(jnp.bfloat16)

    valid = m_total - i * tm                       # static m_total, dynamic i
    rows = jax.lax.broadcasted_iota(jnp.int32, y.shape, 0)
    ym = jnp.where(rows < valid, y, 0.0)
    sum_ref[...] = jnp.sum(ym, axis=0, keepdims=True)[None]        # (1,1,cp)
    sq_ref[...] = jnp.sum(ym * ym, axis=0, keepdims=True)[None]    # (1,1,cp)


def _bn_mish_kernel(y_ref, scale_ref, shift_ref, o_ref):
    """Pass 2 (matmul-free): folded BN affine + Mish, bf16 out."""
    z = y_ref[...].astype(jnp.float32) * scale_ref[...] + shift_ref[...]
    o_ref[...] = _mish(z).astype(jnp.bfloat16)


def _bn_mish_res_kernel(y_ref, scale_ref, shift_ref, r_ref, o_ref):
    """Pass 2 with fused residual add (shortcut = split1 + conv3)."""
    z = y_ref[...].astype(jnp.float32) * scale_ref[...] + shift_ref[...]
    o_ref[...] = (_mish(z) + r_ref[...].astype(jnp.float32)).astype(jnp.bfloat16)


# ------------------------------- glue layers ------------------------------- #

def _extract_patches(x_nhwc, ksize, stride, pad):
    """im2col: (N,H,W,C) -> (N,Ho,Wo,ksize*ksize*C), taps ordered (kh,kw,C)."""
    # TODO(synk): 3x3 convs still materialize the 9-tap patch matrix in HBM
    # (XLA glue); an in-kernel halo-DMA tap accumulation would cut that input
    # traffic ~9x.
    n, h, w, c = x_nhwc.shape
    xp = jnp.pad(x_nhwc, ((0, 0), (pad, pad), (pad, pad), (0, 0)))
    ho = (h + 2 * pad - ksize) // stride + 1
    wo = (w + 2 * pad - ksize) // stride + 1
    cols = []
    for kh in range(ksize):
        for kw in range(ksize):
            cols.append(xp[:, kh:kh + stride * ho:stride,
                           kw:kw + stride * wo:stride, :])
    return jnp.concatenate(cols, axis=-1)


def conv_bn_mish(x_nhwc, cin, w_oihw, gamma, beta, stride, residual=None):
    """One Conv2dBatchLeaky(mish) block on a (possibly lane-padded) NHWC input.

    x_nhwc:  (N, H, W, Cx) bf16; the first `cin` channels are the real input
             (any extra channels are nulled exactly by zero-padded Cin weights).
    Returns  (N, Ho, Wo, cp) bf16 with cp = round_up(cout, 128); channels
             >= cout are exactly zero unless `residual` carries values there.
    """
    cout, _, ksize, _ = w_oihw.shape          # shapes are static under jit
    pad = ksize // 2
    cx = x_nhwc.shape[-1]

    if ksize == 1:
        # Lane-padded input is consumed directly: K = Cx (lane-dense), no copy.
        patches = x_nhwc[:, ::stride, ::stride, :]
        wm = w_oihw.reshape(cout, cin).T                       # (cin, cout)
        wm = jnp.pad(wm, ((0, cx - cin), (0, 0)))              # zero extra Cin
    else:
        # im2col on the REAL channels only (keeps K = 9*cin, not 9*cp).
        patches = _extract_patches(x_nhwc[..., :cin], ksize, stride, pad)
        wm = jnp.transpose(w_oihw, (2, 3, 1, 0)).reshape(ksize * ksize * cin,
                                                         cout)

    n, ho, wo, k = patches.shape
    m = n * ho * wo
    p2 = patches.reshape(m, k).astype(jnp.bfloat16)            # bf16 -> MXU

    cp = _round_up(cout, _LANE)                # lane-dense Cout; full-width
    tm = 1024 if m >= 1024 else _round_up(m, 16)
    grid_m = pl.cdiv(m, tm)                    # no row padding; tail is masked

    w_pad = jnp.pad(wm.astype(jnp.bfloat16), ((0, 0), (0, cp - cout)))
    g_pad = jnp.pad(gamma.astype(jnp.float32), (0, cp - cout))
    b_pad = jnp.pad(beta.astype(jnp.float32), (0, cp - cout))

    p_spec = pl.BlockSpec((tm, k), lambda i: (i, 0))
    w_spec = pl.BlockSpec((k, cp), lambda i: (0, 0))
    row_spec = pl.BlockSpec((tm, cp), lambda i: (i, 0))
    st_spec = pl.BlockSpec((1, 1, cp), lambda i: (i, 0, 0))
    vec_spec = pl.BlockSpec((1, cp), lambda i: (0, 0))

    cparams = pltpu.CompilerParams(dimension_semantics=("parallel",),
                                   vmem_limit_bytes=_VMEM_LIMIT)

    # ---- pass 1: single matmul; emits y (bf16) + per-tile BN partials ----
    y, sums, sqs = pl.pallas_call(
        functools.partial(_matmul_stats_kernel, m_total=m, tm=tm),
        grid=(grid_m,),
        in_specs=[p_spec, w_spec],
        out_specs=(row_spec, st_spec, st_spec),
        out_shape=(jax.ShapeDtypeStruct((m, cp), jnp.bfloat16),
                   jax.ShapeDtypeStruct((grid_m, 1, cp), jnp.float32),
                   jax.ShapeDtypeStruct((grid_m, 1, cp), jnp.float32)),
        compiler_params=cparams,
    )(p2, w_pad)

    # Finalize training-mode BN on tiny (grid_m, cp) partials (XLA glue): fold
    # mean/rstd/gamma/beta into one scale/shift so pass 2 is a single FMA.
    # Padded channels: sum = sq = gamma = 0  ->  scale = shift = 0  ->  output
    # stays exactly zero there.
    inv_m = 1.0 / float(m)                     # divide by the REAL row count
    mean = jnp.sum(sums[:, 0, :], axis=0) * inv_m
    # TODO(synk): E[y^2] - mean^2 can cancel when |mean| >> std; switch to a
    # Welford/shifted accumulation if BN-stat precision ever matters.
    var = jnp.maximum(jnp.sum(sqs[:, 0, :], axis=0) * inv_m - mean * mean, 0.0)
    rstd = jax.lax.rsqrt(var + _BN_EPS)
    scale = (g_pad * rstd).reshape(1, cp)
    shift = (b_pad - mean * g_pad * rstd).reshape(1, cp)

    out_shape = jax.ShapeDtypeStruct((m, cp), jnp.bfloat16)

    # ---- pass 2: matmul-free BN + Mish (+ fused residual), bf16 out ----
    if residual is None:
        out = pl.pallas_call(
            _bn_mish_kernel,
            grid=(grid_m,),
            in_specs=[row_spec, vec_spec, vec_spec],
            out_specs=row_spec,
            out_shape=out_shape,
            compiler_params=cparams,
        )(y, scale, shift)
    else:
        rc = residual.shape[-1]
        if rc < cp:
            residual = jnp.pad(residual, ((0, 0), (0, 0), (0, 0), (0, cp - rc)))
        elif rc > cp:
            residual = residual[..., :cp]
        r2 = residual.reshape(m, cp).astype(jnp.bfloat16)      # bf16 residual
        out = pl.pallas_call(
            _bn_mish_res_kernel,
            grid=(grid_m,),
            in_specs=[row_spec, vec_spec, vec_spec, row_spec],
            out_specs=row_spec,
            out_shape=out_shape,
            compiler_params=cparams,
        )(y, scale, shift, r2)

    return out.reshape(n, ho, wo, cp)


# ------------------------------ Stage2 model ------------------------------- #

def init_stage2_params(nchannels, key):
    """Deterministic parameter init matching Stage2.__init__ shapes."""
    c = nchannels
    specs = {
        "conv1": (2 * c, c, 3),
        "split0": (2 * c, 2 * c, 1),
        "split1": (2 * c, 2 * c, 1),
        "conv2": (c, 2 * c, 1),
        "conv3": (2 * c, c, 3),
        "conv4": (2 * c, 2 * c, 1),
    }
    params = {}
    for i, (name, (cout, cin, k)) in enumerate(specs.items()):
        kw_key, g_key, b_key = jax.random.split(jax.random.fold_in(key, i), 3)
        params[name] = {
            "w": 0.1 * jax.random.normal(kw_key, (cout, cin, k, k), jnp.float32),
            "gamma": 1.0 + 0.1 * jax.random.normal(g_key, (cout,), jnp.float32),
            "beta": 0.1 * jax.random.normal(b_key, (cout,), jnp.float32),
        }
    return params


@jax.jit
def stage2_forward(x_nchw, params):
    # TODO(synk): at tiny shapes (everything fits in VMEM) the whole Stage2
    # could be fused into one or two pallas_calls with resident weights; the
    # per-block structure below is kept for generality.
    c = params["conv2"]["w"].shape[0]                         # nchannels
    x = jnp.transpose(x_nchw, (0, 2, 3, 1)).astype(jnp.bfloat16)  # NCHW->NHWC

    def blk(p, inp, cin, stride, residual=None):
        return conv_bn_mish(inp, cin, p["w"], p["gamma"], p["beta"], stride,
                            residual=residual)

    conv1 = blk(params["conv1"], x, cin=c, stride=2)

    # split0 / split1 read the same conv1 activation -> one fused wide 1x1
    # matmul (BN stats are per-channel, so fusing along Cout is exact).  Order
    # the outputs [split1, split0] so split1 occupies channels [0, 2c) and the
    # lane-padded tensor can feed conv2 / the residual directly; downstream
    # zero-padded Cin weights null the split0 channels exactly.
    c2 = params["split1"]["w"].shape[0]                       # 2c
    w_s = jnp.concatenate([params["split1"]["w"], params["split0"]["w"]], axis=0)
    g_s = jnp.concatenate([params["split1"]["gamma"], params["split0"]["gamma"]])
    b_s = jnp.concatenate([params["split1"]["beta"], params["split0"]["beta"]])
    split01 = conv_bn_mish(conv1, 2 * c, w_s, g_s, b_s, stride=1)

    conv2 = blk(params["conv2"], split01, cin=c2, stride=1)
    # shortcut = split1 + conv3 : residual add fused into conv3's epilogue.
    # (Channels >= 2c of `shortcut` carry split0 values; conv4's zero-padded
    #  Cin weights ignore them exactly.)
    shortcut = blk(params["conv3"], conv2, cin=c, stride=1, residual=split01)
    conv4 = blk(params["conv4"], shortcut, cin=c2, stride=1)

    split0 = split01[..., c2:2 * c2]                          # real split0
    route = jnp.concatenate([split0, conv4[..., :c2]], axis=-1)   # channel cat
    return jnp.transpose(route, (0, 3, 1, 2)).astype(jnp.float32)  # NHWC->NCHW


if __name__ == "__main__":
    key = jax.random.PRNGKey(0)
    x_key, p_key = jax.random.split(key)

    B, C, H, W = 2, 4, 16, 16
    x = jax.random.normal(x_key, (B, C, H, W), jnp.float32)
    params = init_stage2_params(C, p_key)

    out = stage2_forward(x, params)
    out = jax.block_until_ready(out)

    expected_shape = (B, 4 * C, H // 2, W // 2)   # (2, 16, 8, 8)
    assert out.shape == expected_shape, (out.shape, expected_shape)
    assert bool(jnp.all(jnp.isfinite(out)))
    print("KERNEL_OK")
</pallas_src>

<mosaic_0001>
module attributes {stable_mosaic.version = 11 : i64} {
  func.func @_matmul_stats_kernel(%arg0: i32, %arg1: memref<128x36xbf16, #tpu.memory_space<vmem>>, %arg2: memref<36x128xbf16, #tpu.memory_space<vmem>>, %arg3: memref<128x128xbf16, #tpu.memory_space<vmem>>, %arg4: memref<1x1x128xf32, #tpu.memory_space<vmem>>, %arg5: memref<1x1x128xf32, #tpu.memory_space<vmem>>) attributes {dimension_semantics = [#tpu.dimension_semantics<parallel>], iteration_bounds = array<i64: 1>, scalar_prefetch = 0 : i64, scratch_operands = 0 : i64, tpu.core_type = #tpu.core_type<tc>, window_params = [{transform_indices = @transform_0, window_bounds = array<i64: 128, 36>}, {pipeline_mode = #tpu.pipeline_mode<synchronous>, transform_indices = @transform_1, window_bounds = array<i64: 36, 128>}, {transform_indices = @transform_2, window_bounds = array<i64: 128, 128>}, {transform_indices = @transform_3, window_bounds = array<i64: 1, 1, 128>}, {transform_indices = @transform_4, window_bounds = array<i64: 1, 1, 128>}]} {
    %c0 = arith.constant 0 : index
    %c0_0 = arith.constant 0 : index
    %0 = vector.load %arg1[%c0, %c0_0] : memref<128x36xbf16, #tpu.memory_space<vmem>>, vector<128x36xbf16>
    %c0_1 = arith.constant 0 : index
    %c0_2 = arith.constant 0 : index
    %1 = vector.load %arg2[%c0_1, %c0_2] : memref<36x128xbf16, #tpu.memory_space<vmem>>, vector<36x128xbf16>
    %cst = arith.constant dense<0.000000e+00> : vector<128x128xf32>
    %2 = tpu.matmul %0, %1, %cst {dimension_numbers = #tpu.dot_dimension_numbers<[1], [0], [0], [1], [0, 0, 1, 1], [], []>} : vector<128x36xbf16>, vector<36x128xbf16>, vector<128x128xf32> -> vector<128x128xf32>
    %3 = arith.truncf %2 : vector<128x128xf32> to vector<128x128xbf16>
    %c0_3 = arith.constant 0 : index
    %c0_4 = arith.constant 0 : index
    %4 = vector.load %arg3[%c0_3, %c0_4] : memref<128x128xbf16, #tpu.memory_space<vmem>>, vector<128x128xbf16>
    tpu.vector_store %arg3[%c0_3, %c0_4], %3 {strides = array<i32>} : memref<128x128xbf16, #tpu.memory_space<vmem>>, vector<128x128xbf16>,
    %c128_i32 = arith.constant 128 : i32
    %5 = arith.muli %arg0, %c128_i32 : i32
    %c128_i32_5 = arith.constant 128 : i32
    %6 = arith.subi %c128_i32_5, %5 : i32
    %7 = tpu.iota {dimensions = array<i32: 0>} : vector<128x128xi32>
    %8 = vector.broadcast %6 : i32 to vector<128x128xi32>
    %9 = arith.cmpi slt, %7, %8 : vector<128x128xi32>
    %cst_6 = arith.constant 0.000000e+00 : f32
    %10 = vector.broadcast %cst_6 : f32 to vector<128x128xf32>
    %11 = arith.select %9, %2, %10 : vector<128x128xi1>, vector<128x128xf32>
    %cst_7 = arith.constant dense<0.000000e+00> : vector<128xf32>
    %12 = vector.multi_reduction <add>, %11, %cst_7 [0] : vector<128x128xf32> to vector<128xf32>
    %13 = vector.shape_cast %12 : vector<128xf32> to vector<1x128xf32>
    %14 = vector.shape_cast %13 : vector<1x128xf32> to vector<1x1x128xf32>
    %c0_8 = arith.constant 0 : index
    %c0_9 = arith.constant 0 : index
    %c0_10 = arith.constant 0 : index
    %15 = vector.load %arg4[%c0_8, %c0_9, %c0_10] : memref<1x1x128xf32, #tpu.memory_space<vmem>>, vector<1x1x128xf32>
    tpu.vector_store %arg4[%c0_8, %c0_9, %c0_10], %14 {strides = array<i32>} : memref<1x1x128xf32, #tpu.memory_space<vmem>>, vector<1x1x128xf32>,
    %16 = arith.mulf %11, %11 : vector<128x128xf32>
    %cst_11 = arith.constant dense<0.000000e+00> : vector<128xf32>
    %17 = vector.multi_reduction <add>, %16, %cst_11 [0] : vector<128x128xf32> to vector<128xf32>
    %18 = vector.shape_cast %17 : vector<128xf32> to vector<1x128xf32>
    %19 = vector.shape_cast %18 : vector<1x128xf32> to vector<1x1x128xf32>
    %c0_12 = arith.constant 0 : index
    %c0_13 = arith.constant 0 : index
    %c0_14 = arith.constant 0 : index
    %20 = vector.load %arg5[%c0_12, %c0_13, %c0_14] : memref<1x1x128xf32, #tpu.memory_space<vmem>>, vector<1x1x128xf32>
    tpu.vector_store %arg5[%c0_12, %c0_13, %c0_14], %19 {strides = array<i32>} : memref<1x1x128xf32, #tpu.memory_space<vmem>>, vector<1x1x128xf32>,
    return
  }
  func.func @transform_0(%arg0: i32) -> (i32, i32) {
    %c0_i32 = arith.constant 0 : i32
    %c0_i32_0 = arith.constant 0 : i32
    return %arg0, %c0_i32 : i32, i32
  }
  func.func @transform_1(%arg0: i32) -> (i32, i32) {
    %c0_i32 = arith.constant 0 : i32
    %c0_i32_0 = arith.constant 0 : i32
    %c0_i32_1 = arith.constant 0 : i32
    return %c0_i32, %c0_i32_0 : i32, i32
  }
  func.func @transform_2(%arg0: i32) -> (i32, i32) {
    %c0_i32 = arith.constant 0 : i32
    %c0_i32_0 = arith.constant 0 : i32
    return %arg0, %c0_i32 : i32, i32
  }
  func.func @transform_3(%arg0: i32) -> (i32, i32, i32) {
    %c0_i32 = arith.constant 0 : i32
    %c0_i32_0 = arith.constant 0 : i32
    %c0_i32_1 = arith.constant 0 : i32
    return %arg0, %c0_i32, %c0_i32_0 : i32, i32, i32
  }
  func.func @transform_4(%arg0: i32) -> (i32, i32, i32) {
    %c0_i32 = arith.constant 0 : i32
    %c0_i32_0 = arith.constant 0 : i32
    %c0_i32_1 = arith.constant 0 : i32
    return %arg0, %c0_i32, %c0_i32_0 : i32, i32, i32
  }
}

module attributes {stable_mosaic.version = 11 : i64} {
  func.func @_bn_mish_kernel(%arg0: i32, %arg1: memref<128x128xbf16, #tpu.memory_space<vmem>>, %arg2: memref<1x128xf32, #tpu.memory_space<vmem>>, %arg3: memref<1x128xf32, #tpu.memory_space<vmem>>, %arg4: memref<128x128xbf16, #tpu.memory_space<vmem>>) attributes {dimension_semantics = [#tpu.dimension_semantics<parallel>], iteration_bounds = array<i64: 1>, scalar_prefetch = 0 : i64, scratch_operands = 0 : i64, tpu.core_type = #tpu.core_type<tc>, window_params = [{transform_indices = @transform_0, window_bounds = array<i64: 128, 128>}, {pipeline_mode = #tpu.pipeline_mode<synchronous>, transform_indices = @transform_1, window_bounds = array<i64: 1, 128>}, {pipeline_mode = #tpu.pipeline_mode<synchronous>, transform_indices = @transform_2, window_bounds = array<i64: 1, 128>}, {transform_indices = @transform_3, window_bounds = array<i64: 128, 128>}]} {
    %c0 = arith.constant 0 : index
    %c0_0 = arith.constant 0 : index
    %0 = vector.load %arg1[%c0, %c0_0] : memref<128x128xbf16, #tpu.memory_space<vmem>>, vector<128x128xbf16>
    %1 = arith.extf %0 : vector<128x128xbf16> to vector<128x128xf32>
    %c0_1 = arith.constant 0 : index
    %c0_2 = arith.constant 0 : index
    %2 = vector.load %arg2[%c0_1, %c0_2] : memref<1x128xf32, #tpu.memory_space<vmem>>, vector<1x128xf32>
    %3 = vector.broadcast %2 : vector<1x128xf32> to vector<128x128xf32>
    %4 = arith.mulf %1, %3 : vector<128x128xf32>
    %c0_3 = arith.constant 0 : index
    %c0_4 = arith.constant 0 : index
    %5 = vector.load %arg3[%c0_3, %c0_4] : memref<1x128xf32, #tpu.memory_space<vmem>>, vector<1x128xf32>
    %6 = vector.broadcast %5 : vector<1x128xf32> to vector<128x128xf32>
    %7 = arith.addf %4, %6 : vector<128x128xf32>
    %cst = arith.constant 2.000000e+01 : f32
    %8 = vector.broadcast %cst : f32 to vector<128x128xf32>
    %9 = arith.minimumf %7, %8 : vector<128x128xf32>
    %10 = math.exp %9 : vector<128x128xf32>
    %cst_5 = arith.constant 2.000000e+00 : f32
    %11 = vector.broadcast %cst_5 : f32 to vector<128x128xf32>
    %12 = arith.addf %10, %11 : vector<128x128xf32>
    %13 = arith.mulf %10, %12 : vector<128x128xf32>
    %cst_6 = arith.constant 2.000000e+00 : f32
    %14 = vector.broadcast %cst_6 : f32 to vector<128x128xf32>
    %15 = arith.addf %13, %14 : vector<128x128xf32>
    %16 = tpu.reciprocal %15 {approx = true} : vector<128x128xf32> -> vector<128x128xf32>
    %17 = arith.mulf %13, %16 : vector<128x128xf32>
    %18 = arith.mulf %7, %17 : vector<128x128xf32>
    %19 = arith.truncf %18 : vector<128x128xf32> to vector<128x128xbf16>
    %c0_7 = arith.constant 0 : index
    %c0_8 = arith.constant 0 : index
    %20 = vector.load %arg4[%c0_7, %c0_8] : memref<128x128xbf16, #tpu.memory_space<vmem>>, vector<128x128xbf16>
    tpu.vector_store %arg4[%c0_7, %c0_8], %19 {strides = array<i32>} : memref<128x128xbf16, #tpu.memory_space<vmem>>, vector<128x128xbf16>,
    return
  }
  func.func @transform_0(%arg0: i32) -> (i32, i32) {
    %c0_i32 = arith.constant 0 : i32
    %c0_i32_0 = arith.constant 0 : i32
    return %arg0, %c0_i32 : i32, i32
  }
  func.func @transform_1(%arg0: i32) -> (i32, i32) {
    %c0_i32 = arith.constant 0 : i32
    %c0_i32_0 = arith.constant 0 : i32
    %c0_i32_1 = arith.constant 0 : i32
    return %c0_i32, %c0_i32_0 : i32, i32
  }
  func.func @transform_2(%arg0: i32) -> (i32, i32) {
    %c0_i32 = arith.constant 0 : i32
    %c0_i32_0 = arith.constant 0 : i32
    %c0_i32_1 = arith.constant 0 : i32
    return %c0_i32, %c0_i32_0 : i32, i32
  }
  func.func @transform_3(%arg0: i32) -> (i32, i32) {
    %c0_i32 = arith.constant 0 : i32
    %c0_i32_0 = arith.constant 0 : i32
    return %arg0, %c0_i32 : i32, i32
  }
}

module attributes {stable_mosaic.version = 11 : i64} {
  func.func @_matmul_stats_kernel(%arg0: i32, %arg1: memref<128x128xbf16, #tpu.memory_space<vmem>>, %arg2: memref<128x128xbf16, #tpu.memory_space<vmem>>, %arg3: memref<128x128xbf16, #tpu.memory_space<vmem>>, %arg4: memref<1x1x128xf32, #tpu.memory_space<vmem>>, %arg5: memref<1x1x128xf32, #tpu.memory_space<vmem>>) attributes {dimension_semantics = [#tpu.dimension_semantics<parallel>], iteration_bounds = array<i64: 1>, scalar_prefetch = 0 : i64, scratch_operands = 0 : i64, tpu.core_type = #tpu.core_type<tc>, window_params = [{transform_indices = @transform_0, window_bounds = array<i64: 128, 128>}, {pipeline_mode = #tpu.pipeline_mode<synchronous>, transform_indices = @transform_1, window_bounds = array<i64: 128, 128>}, {transform_indices = @transform_2, window_bounds = array<i64: 128, 128>}, {transform_indices = @transform_3, window_bounds = array<i64: 1, 1, 128>}, {transform_indices = @transform_4, window_bounds = array<i64: 1, 1, 128>}]} {
    %c0 = arith.constant 0 : index
    %c0_0 = arith.constant 0 : index
    %0 = vector.load %arg1[%c0, %c0_0] : memref<128x128xbf16, #tpu.memory_space<vmem>>, vector<128x128xbf16>
    %c0_1 = arith.constant 0 : index
    %c0_2 = arith.constant 0 : index
    %1 = vector.load %arg2[%c0_1, %c0_2] : memref<128x128xbf16, #tpu.memory_space<vmem>>, vector<128x128xbf16>
    %cst = arith.constant dense<0.000000e+00> : vector<128x128xf32>
    %2 = tpu.matmul %0, %1, %cst {dimension_numbers = #tpu.dot_dimension_numbers<[1], [0], [0], [1], [0, 0, 1, 1], [], []>} : vector<128x128xbf16>, vector<128x128xbf16>, vector<128x128xf32> -> vector<128x128xf32>
    %3 = arith.truncf %2 : vector<128x128xf32> to vector<128x128xbf16>
    %c0_3 = arith.constant 0 : index
    %c0_4 = arith.constant 0 : index
    %4 = vector.load %arg3[%c0_3, %c0_4] : memref<128x128xbf16, #tpu.memory_space<vmem>>, vector<128x128xbf16>
    tpu.vector_store %arg3[%c0_3, %c0_4], %3 {strides = array<i32>} : memref<128x128xbf16, #tpu.memory_space<vmem>>, vector<128x128xbf16>,
    %c128_i32 = arith.constant 128 : i32
    %5 = arith.muli %arg0, %c128_i32 : i32
    %c128_i32_5 = arith.constant 128 : i32
    %6 = arith.subi %c128_i32_5, %5 : i32
    %7 = tpu.iota {dimensions = array<i32: 0>} : vector<128x128xi32>
    %8 = vector.broadcast %6 : i32 to vector<128x128xi32>
    %9 = arith.cmpi slt, %7, %8 : vector<128x128xi32>
    %cst_6 = arith.constant 0.000000e+00 : f32
    %10 = vector.broadcast %cst_6 : f32 to vector<128x128xf32>
    %11 = arith.select %9, %2, %10 : vector<128x128xi1>, vector<128x128xf32>
    %cst_7 = arith.constant dense<0.000000e+00> : vector<128xf32>
    %12 = vector.multi_reduction <add>, %11, %cst_7 [0] : vector<128x128xf32> to vector<128xf32>
    %13 = vector.shape_cast %12 : vector<128xf32> to vector<1x128xf32>
    %14 = vector.shape_cast %13 : vector<1x128xf32> to vector<1x1x128xf32>
    %c0_8 = arith.constant 0 : index
    %c0_9 = arith.constant 0 : index
    %c0_10 = arith.constant 0 : index
    %15 = vector.load %arg4[%c0_8, %c0_9, %c0_10] : memref<1x1x128xf32, #tpu.memory_space<vmem>>, vector<1x1x128xf32>
    tpu.vector_store %arg4[%c0_8, %c0_9, %c0_10], %14 {strides = array<i32>} : memref<1x1x128xf32, #tpu.memory_space<vmem>>, vector<1x1x128xf32>,
    %16 = arith.mulf %11, %11 : vector<128x128xf32>
    %cst_11 = arith.constant dense<0.000000e+00> : vector<128xf32>
    %17 = vector.multi_reduction <add>, %16, %cst_11 [0] : vector<128x128xf32> to vector<128xf32>
    %18 = vector.shape_cast %17 : vector<128xf32> to vector<1x128xf32>
    %19 = vector.shape_cast %18 : vector<1x128xf32> to vector<1x1x128xf32>
    %c0_12 = arith.constant 0 : index
    %c0_13 = arith.constant 0 : index
    %c0_14 = arith.constant 0 : index
    %20 = vector.load %arg5[%c0_12, %c0_13, %c0_14] : memref<1x1x128xf32, #tpu.memory_space<vmem>>, vector<1x1x128xf32>
    tpu.vector_store %arg5[%c0_12, %c0_13, %c0_14], %19 {strides = array<i32>} : memref<1x1x128xf32, #tpu.memory_space<vmem>>, vector<1x1x128xf32>,
    return
  }
  func.func @transform_0(%arg0: i32) -> (i32, i32) {
    %c0_i32 = arith.constant 0 : i32
    %c0_i32_0 = arith.constant 0 : i32
    return %arg0, %c0_i32 : i32, i32
  }
  func.func @transform_1(%arg0: i32) -> (i32, i32) {
    %c0_i32 = arith.constant 0 : i32
    %c0_i32_0 = arith.constant 0 : i32
    %c0_i32_1 = arith.constant 0 : i32
    return %c0_i32, %c0_i32_0 : i32, i32
  }
  func.func @transform_2(%arg0: i32) -> (i32, i32) {
    %c0_i32 = arith.constant 0 : i32
    %c0_i32_0 = arith.constant 0 : i32
    return %arg0, %c0_i32 : i32, i32
  }
  func.func @transform_3(%arg0: i32) -> (i32, i32, i32) {
    %c0_i32 = arith.constant 0 : i32
    %c0_i32_0 = arith.constant 0 : i32
    %c0_i32_1 = arith.constant 0 : i32
    return %arg0, %c0_i32, %c0_i32_0 : i32, i32, i32
  }
  func.func @transform_4(%arg0: i32) -> (i32, i32, i32) {
    %c0_i32 = arith.constant 0 : i32
    %c0_i32_0 = arith.constant 0 : i32
    %c0_i32_1 = arith.constant 0 : i32
    return %arg0, %c0_i32, %c0_i32_0 : i32, i32, i32
  }
}

module attributes {stable_mosaic.version = 11 : i64} {
  func.func @_bn_mish_res_kernel(%arg0: i32, %arg1: memref<128x128xbf16, #tpu.memory_space<vmem>>, %arg2: memref<1x128xf32, #tpu.memory_space<vmem>>, %arg3: memref<1x128xf32, #tpu.memory_space<vmem>>, %arg4: memref<128x128xbf16, #tpu.memory_space<vmem>>, %arg5: memref<128x128xbf16, #tpu.memory_space<vmem>>) attributes {dimension_semantics = [#tpu.dimension_semantics<parallel>], iteration_bounds = array<i64: 1>, scalar_prefetch = 0 : i64, scratch_operands = 0 : i64, tpu.core_type = #tpu.core_type<tc>, window_params = [{transform_indices = @transform_0, window_bounds = array<i64: 128, 128>}, {pipeline_mode = #tpu.pipeline_mode<synchronous>, transform_indices = @transform_1, window_bounds = array<i64: 1, 128>}, {pipeline_mode = #tpu.pipeline_mode<synchronous>, transform_indices = @transform_2, window_bounds = array<i64: 1, 128>}, {transform_indices = @transform_3, window_bounds = array<i64: 128, 128>}, {transform_indices = @transform_4, window_bounds = array<i64: 128, 128>}]} {
    %c0 = arith.constant 0 : index
    %c0_0 = arith.constant 0 : index
    %0 = vector.load %arg1[%c0, %c0_0] : memref<128x128xbf16, #tpu.memory_space<vmem>>, vector<128x128xbf16>
    %1 = arith.extf %0 : vector<128x128xbf16> to vector<128x128xf32>
    %c0_1 = arith.constant 0 : index
    %c0_2 = arith.constant 0 : index
    %2 = vector.load %arg2[%c0_1, %c0_2] : memref<1x128xf32, #tpu.memory_space<vmem>>, vector<1x128xf32>
    %3 = vector.broadcast %2 : vector<1x128xf32> to vector<128x128xf32>
    %4 = arith.mulf %1, %3 : vector<128x128xf32>
    %c0_3 = arith.constant 0 : index
    %c0_4 = arith.constant 0 : index
    %5 = vector.load %arg3[%c0_3, %c0_4] : memref<1x128xf32, #tpu.memory_space<vmem>>, vector<1x128xf32>
    %6 = vector.broadcast %5 : vector<1x128xf32> to vector<128x128xf32>
    %7 = arith.addf %4, %6 : vector<128x128xf32>
    %cst = arith.constant 2.000000e+01 : f32
    %8 = vector.broadcast %cst : f32 to vector<128x128xf32>
    %9 = arith.minimumf %7, %8 : vector<128x128xf32>
    %10 = math.exp %9 : vector<128x128xf32>
    %cst_5 = arith.constant 2.000000e+00 : f32
    %11 = vector.broadcast %cst_5 : f32 to vector<128x128xf32>
    %12 = arith.addf %10, %11 : vector<128x128xf32>
    %13 = arith.mulf %10, %12 : vector<128x128xf32>
    %cst_6 = arith.constant 2.000000e+00 : f32
    %14 = vector.broadcast %cst_6 : f32 to vector<128x128xf32>
    %15 = arith.addf %13, %14 : vector<128x128xf32>
    %16 = tpu.reciprocal %15 {approx = true} : vector<128x128xf32> -> vector<128x128xf32>
    %17 = arith.mulf %13, %16 : vector<128x128xf32>
    %18 = arith.mulf %7, %17 : vector<128x128xf32>
    %c0_7 = arith.constant 0 : index
    %c0_8 = arith.constant 0 : index
    %19 = vector.load %arg4[%c0_7, %c0_8] : memref<128x128xbf16, #tpu.memory_space<vmem>>, vector<128x128xbf16>
    %20 = arith.extf %19 : vector<128x128xbf16> to vector<128x128xf32>
    %21 = arith.addf %18, %20 : vector<128x128xf32>
    %22 = arith.truncf %21 : vector<128x128xf32> to vector<128x128xbf16>
    %c0_9 = arith.constant 0 : index
    %c0_10 = arith.constant 0 : index
    %23 = vector.load %arg5[%c0_9, %c0_10] : memref<128x128xbf16, #tpu.memory_space<vmem>>, vector<128x128xbf16>
    tpu.vector_store %arg5[%c0_9, %c0_10], %22 {strides = array<i32>} : memref<128x128xbf16, #tpu.memory_space<vmem>>, vector<128x128xbf16>,
    return
  }
  func.func @transform_0(%arg0: i32) -> (i32, i32) {
    %c0_i32 = arith.constant 0 : i32
    %c0_i32_0 = arith.constant 0 : i32
    return %arg0, %c0_i32 : i32, i32
  }
  func.func @transform_1(%arg0: i32) -> (i32, i32) {
    %c0_i32 = arith.constant 0 : i32
    %c0_i32_0 = arith.constant 0 : i32
    %c0_i32_1 = arith.constant 0 : i32
    return %c0_i32, %c0_i32_0 : i32, i32
  }
  func.func @transform_2(%arg0: i32) -> (i32, i32) {
    %c0_i32 = arith.constant 0 : i32
    %c0_i32_0 = arith.constant 0 : i32
    %c0_i32_1 = arith.constant 0 : i32
    return %c0_i32, %c0_i32_0 : i32, i32
  }
  func.func @transform_3(%arg0: i32) -> (i32, i32) {
    %c0_i32 = arith.constant 0 : i32
    %c0_i32_0 = arith.constant 0 : i32
    return %arg0, %c0_i32 : i32, i32
  }
  func.func @transform_4(%arg0: i32) -> (i32, i32) {
    %c0_i32 = arith.constant 0 : i32
    %c0_i32_0 = arith.constant 0 : i32
    return %arg0, %c0_i32 : i32, i32
  }
}

</mosaic_0001>

<llo_original>
// kernel: stage2_forward.10
$region0: #{stage2_forward.10}
  #allocation0 [shape = 'u32[]', space=smem, size = 0x4, offset = 0x4, fixed_abs, tag = 'smem constant byte address 0x4 - core index']
  #allocation1 [shape = 'u32[72,128]{1,0:T(1,128)}', space=vmem, size = 0x9000, scoped, tag = 'internal scratch']
  %s0 = inlined_call_operand.vmem [shape: bf16[128,36], index: 0, kind: input, shape index: {}]
  %s1 = inlined_call_operand.vmem [shape: bf16[36,128], index: 1, kind: input, shape index: {}]
  %s2 = inlined_call_operand.vmem [shape: bf16[128,128], index: 2, kind: output, shape index: {0}]
  %s3 = inlined_call_operand.vmem [shape: f32[1,1,128], index: 3, kind: output, shape index: {1}]
  %s4 = inlined_call_operand.vmem [shape: f32[1,1,128], index: 4, kind: output, shape index: {2}]
  %5 = xla_tuple %s2, %s3, %s4
  %s6 = sld [smem:[#allocation0]]
  $region34: #{stage2_forward.10} parent=0
    _
  %s8 = ssub.s32 1, %s6
  %s9 = scalar_select 0, %s8, %s6
  // Predicated region
  $region2: #{stage2_forward.10} parent=0 // pred_check
    _
  $region3: #{stage2_forward.10} parent=0 // pred_check_branch
    %11 = sbr.rel (0) target = $region5
  $region4: #{stage2_forward.10} parent=0 // pred_region
    _
  $region5: #{stage2_forward.10} parent=0 // pred_fallthru
    _
  // Predicated region
  $region6: #{stage2_forward.10} parent=0 // pred_check
    _
  $region7: #{stage2_forward.10} parent=0 // pred_check_branch
    %13 = sbr.rel (0) target = $region9
  $region8: #{stage2_forward.10} parent=0 // pred_region
    _
  $region9: #{stage2_forward.10} parent=0 // pred_fallthru
    _
  %v15 = vld [vmem:[%s0] sm:$0xf]
  %v16 = vld [vmem:[%s0 + $0x4] sm:$0xf]
  %v17 = vld [vmem:[%s0 + $0x8] sm:$0xf]
  %v18 = vld [vmem:[%s0 + $0xc] sm:$0xf]
  %v19 = vld [vmem:[%s0 + $0x10] sm:$0xf]
  %v20 = vld [vmem:[%s0 + $0x14] sm:$0xf]
  %v21 = vld [vmem:[%s0 + $0x18] sm:$0xf]
  %v22 = vld [vmem:[%s0 + $0x1c] sm:$0xf]
  %v23 = vld [vmem:[%s0 + $0x20] sm:$0xf]
  %v24 = vld [vmem:[%s0 + $0x24] sm:$0xf]
  %v25 = vld [vmem:[%s0 + $0x28] sm:$0xf]
  %v26 = vld [vmem:[%s0 + $0x2c] sm:$0xf]
  %v27 = vld [vmem:[%s0 + $0x30] sm:$0xf]
  %v28 = vld [vmem:[%s0 + $0x34] sm:$0xf]
  %v29 = vld [vmem:[%s0 + $0x38] sm:$0xf]
  %v30 = vld [vmem:[%s0 + $0x3c] sm:$0xf]
  %v31 = vld [vmem:[%s1] sm:$0xf]
  %v32 = vld [vmem:[%s1 + $0x4] sm:$0xf]
  %v33 = vld [vmem:[%s1 + $0x8] sm:$0xf]
  %v34 = vld [vmem:[%s1 + $0xc] sm:$0xf]
  %v35 = vld [vmem:[%s1 + $0x10] sm:$0x3]
  %v52 = vunpack.c.l.b16 %v15
  %v53 = vunpack.c.l.b16 %v16
  %v54 = vunpack.c.l.b16 %v17
  %v55 = vunpack.c.l.b16 %v18
  %v56 = vunpack.c.l.b16 %v19
  %v57 = vunpack.c.l.b16 %v20
  %v58 = vunpack.c.l.b16 %v21
  %v59 = vunpack.c.l.b16 %v22
  %v60 = vunpack.c.l.b16 %v23
  %v61 = vunpack.c.l.b16 %v24
  %v62 = vunpack.c.l.b16 %v25
  %v63 = vunpack.c.l.b16 %v26
  %v64 = vunpack.c.l.b16 %v27
  %v65 = vunpack.c.l.b16 %v28
  %v66 = vunpack.c.l.b16 %v29
  %v67 = vunpack.c.l.b16 %v30
  %v68 = vpack.c.b16 %v53, %v52
  %v69 = vpack.c.b16 %v55, %v54
  %v70 = vpack.c.b16 %v57, %v56
  %v71 = vpack.c.b16 %v59, %v58
  %v72 = vpack.c.b16 %v61, %v60
  %v73 = vpack.c.b16 %v63, %v62
  %v74 = vpack.c.b16 %v65, %v64
  %v75 = vpack.c.b16 %v67, %v66
  %v81 = vunpack.c.l.b16 %v31
  %v82 = vunpack.c.l.b16 %v32
  %v83 = vunpack.c.l.b16 %v33
  %v84 = vunpack.c.l.b16 %v34
  %v85 = vunpack.c.l.b16 %v35
  %v86 = vpack.c.b16 %v82, %v81
  %v87 = vpack.c.b16 %v84, %v83
  %v88 = vpack.c.b16 %v85, %v85
  %vm91 = vcmask 293888
  %v93 = vsel %vm91, %v68, 0
  %v96 = vsel %vm91, %v69, 0
  %v99 = vsel %vm91, %v70, 0
  %v102 = vsel %vm91, %v71, 0
  %v105 = vsel %vm91, %v72, 0
  %v108 = vsel %vm91, %v73, 0
  %v111 = vsel %vm91, %v74, 0
  %v114 = vsel %vm91, %v75, 0
  %vm116 = vcmask 1041408
  %v118 = vsel %vm116, %v88, 0
  %120 = vmatpush.bf16.msra.mxu0 0
  %121 = vmatpush.bf16.msra.mxu0 0
  %122 = vmatpush.bf16.msra.mxu0 0
  %123 = vmatpush.bf16.msra.mxu0 0
  %124 = vmatpush.bf16.msra.mxu0 0
  %125 = vmatpush.bf16.msra.mxu0 %v118
  %126 = vmatpush.bf16.msra.mxu0 %v87
  %127 = vmatpush.bf16.msra.mxu0 %v86
  %128 = vmatmul.bf16.gmra.mxu0 %v93
  %v129 = vpop.f32.mrf.mxu0
  %v130 = vadd.f32 0.0, %v129
  %v131 = vpop.f32.mrf.mxu0
  %v132 = vadd.f32 0.0, %v131
  %133 = vmatmul.bf16.gmra.mxu0 %v96
  %v134 = vpop.f32.mrf.mxu0
  %v135 = vadd.f32 0.0, %v134
  %v136 = vpop.f32.mrf.mxu0
  %v137 = vadd.f32 0.0, %v136
  %138 = vmatmul.bf16.gmra.mxu0 %v99
  %v139 = vpop.f32.mrf.mxu0
  %v140 = vadd.f32 0.0, %v139
  %v141 = vpop.f32.mrf.mxu0
  %v142 = vadd.f32 0.0, %v141
  %143 = vmatmul.bf16.gmra.mxu0 %v102
  %v144 = vpop.f32.mrf.mxu0
  %v145 = vadd.f32 0.0, %v144
  %v146 = vpop.f32.mrf.mxu0
  %v147 = vadd.f32 0.0, %v146
  %148 = vmatmul.bf16.gmra.mxu0 %v105
  %v149 = vpop.f32.mrf.mxu0
  %v150 = vadd.f32 0.0, %v149
  %v151 = vpop.f32.mrf.mxu0
  %v152 = vadd.f32 0.0, %v151
  %153 = vmatmul.bf16.gmra.mxu0 %v108
  %v154 = vpop.f32.mrf.mxu0
  %v155 = vadd.f32 0.0, %v154
  %v156 = vpop.f32.mrf.mxu0
  %v157 = vadd.f32 0.0, %v156
  %158 = vmatmul.bf16.gmra.mxu0 %v111
  %v159 = vpop.f32.mrf.mxu0
  %v160 = vadd.f32 0.0, %v159
  %v161 = vpop.f32.mrf.mxu0
  %v162 = vadd.f32 0.0, %v161
  %163 = vmatmul.bf16.gmra.mxu0 %v114
  %v164 = vpop.f32.mrf.mxu0
  %v165 = vadd.f32 0.0, %v164
  %v166 = vpop.f32.mrf.mxu0
  %v167 = vadd.f32 0.0, %v166
  %168 = vdwg.mxu0
  %v169 = vpack.c.bf16 %v130, %v130
  %v170 = vpack.c.bf16 %v132, %v132
  %v171 = vpack.c.bf16 %v135, %v135
  %v172 = vpack.c.bf16 %v137, %v137
  %v173 = vpack.c.bf16 %v140, %v140
  %v174 = vpack.c.bf16 %v142, %v142
  %v175 = vpack.c.bf16 %v145, %v145
  %v176 = vpack.c.bf16 %v147, %v147
  %v177 = vpack.c.bf16 %v150, %v150
  %v178 = vpack.c.bf16 %v152, %v152
  %v179 = vpack.c.bf16 %v155, %v155
  %v180 = vpack.c.bf16 %v157, %v157
  %v181 = vpack.c.bf16 %v160, %v160
  %v182 = vpack.c.bf16 %v162, %v162
  %v183 = vpack.c.bf16 %v165, %v165
  %v184 = vpack.c.bf16 %v167, %v167
  %185 = vst [vmem:[%s2] sm:$0xf] %v169
  %186 = vst [vmem:[%s2 + $0x4] sm:$0xf] %v170
  %187 = vst [vmem:[%s2 + $0x8] sm:$0xf] %v171
  %188 = vst [vmem:[%s2 + $0xc] sm:$0xf] %v172
  %189 = vst [vmem:[%s2 + $0x10] sm:$0xf] %v173
  %190 = vst [vmem:[%s2 + $0x14] sm:$0xf] %v174
  %191 = vst [vmem:[%s2 + $0x18] sm:$0xf] %v175
  %192 = vst [vmem:[%s2 + $0x1c] sm:$0xf] %v176
  %193 = vst [vmem:[%s2 + $0x20] sm:$0xf] %v177
  %194 = vst [vmem:[%s2 + $0x24] sm:$0xf] %v178
  %195 = vst [vmem:[%s2 + $0x28] sm:$0xf] %v179
  %196 = vst [vmem:[%s2 + $0x2c] sm:$0xf] %v180
  %197 = vst [vmem:[%s2 + $0x30] sm:$0xf] %v181
  %198 = vst [vmem:[%s2 + $0x34] sm:$0xf] %v182
  %199 = vst [vmem:[%s2 + $0x38] sm:$0xf] %v183
  %200 = vst [vmem:[%s2 + $0x3c] sm:$0xf] %v184
  %s201 = smul.u32 0, 128
  %s202 = ssub.s32 128, %s201
  %v203 = vlaneseq
  %v204 = vshrl.u32 %v203, 7
  %v205 = vadd.s32 %v204, 8
  %v206 = vadd.s32 %v204, 16
  %v207 = vadd.s32 %v204, 24
  %v208 = vadd.s32 %v204, 32
  %v209 = vadd.s32 %v204, 40
  %v210 = vadd.s32 %v204, 48
  %v211 = vadd.s32 %v204, 56
  %v212 = vadd.s32 %v204, 64
  %v213 = vadd.s32 %v204, 72
  %v214 = vadd.s32 %v204, 80
  %v215 = vadd.s32 %v204, 88
  %v216 = vadd.s32 %v204, 96
  %v217 = vadd.s32 %v204, 104
  %v218 = vadd.s32 %v204, 112
  %v219 = vadd.s32 %v204, 120
  %v220 = vstv %s202
  %vm221 = vcmp.lt.s32.totalorder %v204, %v220
  %vm222 = vcmp.lt.s32.totalorder %v205, %v220
  %vm223 = vcmp.lt.s32.totalorder %v206, %v220
  %vm224 = vcmp.lt.s32.totalorder %v207, %v220
  %vm225 = vcmp.lt.s32.totalorder %v208, %v220
  %vm226 = vcmp.lt.s32.totalorder %v209, %v220
  %vm227 = vcmp.lt.s32.totalorder %v210, %v220
  %vm228 = vcmp.lt.s32.totalorder %v211, %v220
  %vm229 = vcmp.lt.s32.totalorder %v212, %v220
  %vm230 = vcmp.lt.s32.totalorder %v213, %v220
  %vm231 = vcmp.lt.s32.totalorder %v214, %v220
  %vm232 = vcmp.lt.s32.totalorder %v215, %v220
  %vm233 = vcmp.lt.s32.totalorder %v216, %v220
  %vm234 = vcmp.lt.s32.totalorder %v217, %v220
  %vm235 = vcmp.lt.s32.totalorder %v218, %v220
  %vm236 = vcmp.lt.s32.totalorder %v219, %v220
  %v237 = vsel %vm221, %v130, 0.0
  %v238 = vsel %vm222, %v132, 0.0
  %v239 = vsel %vm223, %v135, 0.0
  %v240 = vsel %vm224, %v137, 0.0
  %v241 = vsel %vm225, %v140, 0.0
  %v242 = vsel %vm226, %v142, 0.0
  %v243 = vsel %vm227, %v145, 0.0
  %v244 = vsel %vm228, %v147, 0.0
  %v245 = vsel %vm229, %v150, 0.0
  %v246 = vsel %vm230, %v152, 0.0
  %v247 = vsel %vm231, %v155, 0.0
  %v248 = vsel %vm232, %v157, 0.0
  %v249 = vsel %vm233, %v160, 0.0
  %v250 = vsel %vm234, %v162, 0.0
  %v251 = vsel %vm235, %v165, 0.0
  %v252 = vsel %vm236, %v167, 0.0
  %v253 = vadd.f32 %v237, %v238
  %v254 = vadd.f32 %v253, %v239
  %v255 = vadd.f32 %v254, %v240
  %v256 = vadd.f32 %v255, %v241
  %v257 = vadd.f32 %v256, %v242
  %v258 = vadd.f32 %v257, %v243
  %v259 = vadd.f32 %v258, %v244
  %v260 = vadd.f32 %v259, %v245
  %v261 = vadd.f32 %v260, %v246
  %v262 = vadd.f32 %v261, %v247
  %v263 = vadd.f32 %v262, %v248
  %v264 = vadd.f32 %v263, %v249
  %v265 = vadd.f32 %v264, %v250
  %v266 = vadd.f32 %v265, %v251
  %v267 = vadd.f32 %v266, %v252
  %v268 = vrot.slane %v267, 4
  %v269 = vadd.f32 %v267, %v268
  %v270 = vrot.slane %v269, 2
  %v271 = vadd.f32 %v269, %v270
  %v272 = vrot.slane %v271, 1
  %v273 = vadd.f32 %v271, %v272
  %274 = vst [vmem:[%s3] sm:$0x1] %v273
  %v275 = vmul.f32 %v237, %v237
  %v276 = vmul.f32 %v238, %v238
  %v277 = vmul.f32 %v239, %v239
  %v278 = vmul.f32 %v240, %v240
  %v279 = vmul.f32 %v241, %v241
  %v280 = vmul.f32 %v242, %v242
  %v281 = vmul.f32 %v243, %v243
  %v282 = vmul.f32 %v244, %v244
  %v283 = vmul.f32 %v245, %v245
  %v284 = vmul.f32 %v246, %v246
  %v285 = vmul.f32 %v247, %v247
  %v286 = vmul.f32 %v248, %v248
  %v287 = vmul.f32 %v249, %v249
  %v288 = vmul.f32 %v250, %v250
  %v289 = vmul.f32 %v251, %v251
  %v290 = vmul.f32 %v252, %v252
  %v291 = vadd.f32 %v275, %v276
  %v292 = vadd.f32 %v291, %v277
  %v293 = vadd.f32 %v292, %v278
  %v294 = vadd.f32 %v293, %v279
  %v295 = vadd.f32 %v294, %v280
  %v296 = vadd.f32 %v295, %v281
  %v297 = vadd.f32 %v296, %v282
  %v298 = vadd.f32 %v297, %v283
  %v299 = vadd.f32 %v298, %v284
  %v300 = vadd.f32 %v299, %v285
  %v301 = vadd.f32 %v300, %v286
  %v302 = vadd.f32 %v301, %v287
  %v303 = vadd.f32 %v302, %v288
  %v304 = vadd.f32 %v303, %v289
  %v305 = vadd.f32 %v304, %v290
  %v306 = vrot.slane %v305, 4
  %v307 = vadd.f32 %v305, %v306
  %v308 = vrot.slane %v307, 2
  %v309 = vadd.f32 %v307, %v308
  %v310 = vrot.slane %v309, 1
  %v311 = vadd.f32 %v309, %v310
  %312 = vst [vmem:[%s4] sm:$0x1] %v311
  // Predicated region
  $region10: #{stage2_forward.10} parent=0 // pred_check
    _
  $region11: #{stage2_forward.10} parent=0 // pred_check_branch
    %314 = sbr.rel (0) target = $region13
  $region12: #{stage2_forward.10} parent=0 // pred_region
    _
  $region13: #{stage2_forward.10} parent=0 // pred_fallthru
    _
  // Predicated region
  $region14: #{stage2_forward.10} parent=0 // pred_check
    _
  $region15: #{stage2_forward.10} parent=0 // pred_check_branch
    %316 = sbr.rel (0) target = $region17
  $region16: #{stage2_forward.10} parent=0 // pred_region
    _
  $region17: #{stage2_forward.10} parent=0 // pred_fallthru
    _
  // Predicated region
  $region18: #{stage2_forward.10} parent=0 // pred_check
    _
  $region19: #{stage2_forward.10} parent=0 // pred_check_branch
    %318 = sbr.rel (0) target = $region21
  $region20: #{stage2_forward.10} parent=0 // pred_region
    _
  $region21: #{stage2_forward.10} parent=0 // pred_fallthru
    _
  // Predicated region
  $region22: #{stage2_forward.10} parent=0 // pred_check
    _
  $region23: #{stage2_forward.10} parent=0 // pred_check_branch
    %320 = sbr.rel (0) target = $region25
  $region24: #{stage2_forward.10} parent=0 // pred_region
    _
  $region25: #{stage2_forward.10} parent=0 // pred_fallthru
    _
  // Predicated region
  $region26: #{stage2_forward.10} parent=0 // pred_check
    _
  $region27: #{stage2_forward.10} parent=0 // pred_check_branch
    %322 = sbr.rel (0) target = $region29
  $region28: #{stage2_forward.10} parent=0 // pred_region
    _
  $region29: #{stage2_forward.10} parent=0 // pred_fallthru
    _
  // Predicated region
  $region30: #{stage2_forward.10} parent=0 // pred_check
    _
  $region31: #{stage2_forward.10} parent=0 // pred_check_branch
    %324 = sbr.rel (0) target = $region33
  $region32: #{stage2_forward.10} parent=0 // pred_region
    _
  $region33: #{stage2_forward.10} parent=0 // pred_fallthru
    _

// kernel: stage2_forward.11
$region0: #{stage2_forward.11}
  #allocation0 [shape = 'u32[]', space=smem, size = 0x4, offset = 0x4, fixed_abs, tag = 'smem constant byte address 0x4 - core index']
  #allocation1 [shape = 'u32[72,128]{1,0:T(1,128)}', space=vmem, size = 0x9000, scoped, tag = 'internal scratch']
  %s0 = inlined_call_operand.vmem [shape: bf16[128,128], index: 0, kind: input, shape index: {}]
  %s1 = inlined_call_operand.vmem [shape: f32[1,128], index: 1, kind: input, shape index: {}]
  %s2 = inlined_call_operand.vmem [shape: f32[1,128], index: 2, kind: input, shape index: {}]
  %s3 = inlined_call_operand.vmem [shape: bf16[128,128], index: 3, kind: output, shape index: {}]
  %s4 = sld [smem:[#allocation0]]
  $region22: #{stage2_forward.11} parent=0
    _
  %s6 = ssub.s32 1, %s4
  %s7 = scalar_select 0, %s6, %s4
  // Predicated region
  $region2: #{stage2_forward.11} parent=0 // pred_check
    _
  $region3: #{stage2_forward.11} parent=0 // pred_check_branch
    %9 = sbr.rel (0) target = $region5
  $region4: #{stage2_forward.11} parent=0 // pred_region
    _
  $region5: #{stage2_forward.11} parent=0 // pred_fallthru
    _
  // Predicated region
  $region6: #{stage2_forward.11} parent=0 // pred_check
    _
  $region7: #{stage2_forward.11} parent=0 // pred_check_branch
    %11 = sbr.rel (0) target = $region9
  $region8: #{stage2_forward.11} parent=0 // pred_region
    _
  $region9: #{stage2_forward.11} parent=0 // pred_fallthru
    _
  // Predicated region
  $region10: #{stage2_forward.11} parent=0 // pred_check
    _
  $region11: #{stage2_forward.11} parent=0 // pred_check_branch
    %13 = sbr.rel (0) target = $region13
  $region12: #{stage2_forward.11} parent=0 // pred_region
    _
  $region13: #{stage2_forward.11} parent=0 // pred_fallthru
    _
  %v14 = vld [vmem:[%s0] sm:$0xf]
  %v15 = vld [vmem:[%s0 + $0x4] sm:$0xf]
  %v16 = vld [vmem:[%s0 + $0x8] sm:$0xf]
  %v17 = vld [vmem:[%s0 + $0xc] sm:$0xf]
  %v18 = vld [vmem:[%s0 + $0x10] sm:$0xf]
  %v19 = vld [vmem:[%s0 + $0x14] sm:$0xf]
  %v20 = vld [vmem:[%s0 + $0x18] sm:$0xf]
  %v21 = vld [vmem:[%s0 + $0x1c] sm:$0xf]
  %v22 = vld [vmem:[%s0 + $0x20] sm:$0xf]
  %v23 = vld [vmem:[%s0 + $0x24] sm:$0xf]
  %v24 = vld [vmem:[%s0 + $0x28] sm:$0xf]
  %v25 = vld [vmem:[%s0 + $0x2c] sm:$0xf]
  %v26 = vld [vmem:[%s0 + $0x30] sm:$0xf]
  %v27 = vld [vmem:[%s0 + $0x34] sm:$0xf]
  %v28 = vld [vmem:[%s0 + $0x38] sm:$0xf]
  %v29 = vld [vmem:[%s0 + $0x3c] sm:$0xf]
  %v30 = vunpack.c.l.bf16 %v14
  %v31 = vunpack.c.l.bf16 %v15
  %v32 = vunpack.c.l.bf16 %v16
  %v33 = vunpack.c.l.bf16 %v17
  %v34 = vunpack.c.l.bf16 %v18
  %v35 = vunpack.c.l.bf16 %v19
  %v36 = vunpack.c.l.bf16 %v20
  %v37 = vunpack.c.l.bf16 %v21
  %v38 = vunpack.c.l.bf16 %v22
  %v39 = vunpack.c.l.bf16 %v23
  %v40 = vunpack.c.l.bf16 %v24
  %v41 = vunpack.c.l.bf16 %v25
  %v42 = vunpack.c.l.bf16 %v26
  %v43 = vunpack.c.l.bf16 %v27
  %v44 = vunpack.c.l.bf16 %v28
  %v45 = vunpack.c.l.bf16 %v29
  %v46 = vld [vmem:[%s1] sm:$0x1]
  %v48 = vperm.slane %v46, 0
  %v50 = vmul.f32 %v30, %v48
  %v51 = vmul.f32 %v31, %v48
  %v52 = vmul.f32 %v32, %v48
  %v53 = vmul.f32 %v33, %v48
  %v54 = vmul.f32 %v34, %v48
  %v55 = vmul.f32 %v35, %v48
  %v56 = vmul.f32 %v36, %v48
  %v57 = vmul.f32 %v37, %v48
  %v58 = vmul.f32 %v38, %v48
  %v59 = vmul.f32 %v39, %v48
  %v60 = vmul.f32 %v40, %v48
  %v61 = vmul.f32 %v41, %v48
  %v62 = vmul.f32 %v42, %v48
  %v63 = vmul.f32 %v43, %v48
  %v64 = vmul.f32 %v44, %v48
  %v65 = vmul.f32 %v45, %v48
  %v66 = vld [vmem:[%s2] sm:$0x1]
  %v68 = vperm.slane %v66, 0
  %v70 = vadd.f32 %v50, %v68
  %v71 = vadd.f32 %v51, %v68
  %v72 = vadd.f32 %v52, %v68
  %v73 = vadd.f32 %v53, %v68
  %v74 = vadd.f32 %v54, %v68
  %v75 = vadd.f32 %v55, %v68
  %v76 = vadd.f32 %v56, %v68
  %v77 = vadd.f32 %v57, %v68
  %v78 = vadd.f32 %v58, %v68
  %v79 = vadd.f32 %v59, %v68
  %v80 = vadd.f32 %v60, %v68
  %v81 = vadd.f32 %v61, %v68
  %v82 = vadd.f32 %v62, %v68
  %v83 = vadd.f32 %v63, %v68
  %v84 = vadd.f32 %v64, %v68
  %v85 = vadd.f32 %v65, %v68
  %v86 = vmin.f32 %v70, 20.0
  %v87 = vmin.f32 %v71, 20.0
  %v88 = vmin.f32 %v72, 20.0
  %v89 = vmin.f32 %v73, 20.0
  %v90 = vmin.f32 %v74, 20.0
  %v91 = vmin.f32 %v75, 20.0
  %v92 = vmin.f32 %v76, 20.0
  %v93 = vmin.f32 %v77, 20.0
  %v94 = vmin.f32 %v78, 20.0
  %v95 = vmin.f32 %v79, 20.0
  %v96 = vmin.f32 %v80, 20.0
  %v97 = vmin.f32 %v81, 20.0
  %v98 = vmin.f32 %v82, 20.0
  %v99 = vmin.f32 %v83, 20.0
  %v100 = vmin.f32 %v84, 20.0
  %v101 = vmin.f32 %v85, 20.0
  %v102 = vmul.f32 %v86, 1.442695
  %v103 = vpow.pop %v102
  %v104 = vmul.f32 %v87, 1.442695
  %v105 = vpow.pop %v104
  %v106 = vmul.f32 %v88, 1.442695
  %v107 = vpow.pop %v106
  %v108 = vmul.f32 %v89, 1.442695
  %v109 = vpow.pop %v108
  %v110 = vmul.f32 %v90, 1.442695
  %v111 = vpow.pop %v110
  %v112 = vmul.f32 %v91, 1.442695
  %v113 = vpow.pop %v112
  %v114 = vmul.f32 %v92, 1.442695
  %v115 = vpow.pop %v114
  %v116 = vmul.f32 %v93, 1.442695
  %v117 = vpow.pop %v116
  %v118 = vmul.f32 %v94, 1.442695
  %v119 = vpow.pop %v118
  %v120 = vmul.f32 %v95, 1.442695
  %v121 = vpow.pop %v120
  %v122 = vmul.f32 %v96, 1.442695
  %v123 = vpow.pop %v122
  %v124 = vmul.f32 %v97, 1.442695
  %v125 = vpow.pop %v124
  %v126 = vmul.f32 %v98, 1.442695
  %v127 = vpow.pop %v126
  %v128 = vmul.f32 %v99, 1.442695
  %v129 = vpow.pop %v128
  %v130 = vmul.f32 %v100, 1.442695
  %v131 = vpow.pop %v130
  %v132 = vmul.f32 %v101, 1.442695
  %v133 = vpow.pop %v132
  %v134 = vadd.f32 %v103, 2.0
  %v135 = vadd.f32 %v105, 2.0
  %v136 = vadd.f32 %v107, 2.0
  %v137 = vadd.f32 %v109, 2.0
  %v138 = vadd.f32 %v111, 2.0
  %v139 = vadd.f32 %v113, 2.0
  %v140 = vadd.f32 %v115, 2.0
  %v141 = vadd.f32 %v117, 2.0
  %v142 = vadd.f32 %v119, 2.0
  %v143 = vadd.f32 %v121, 2.0
  %v144 = vadd.f32 %v123, 2.0
  %v145 = vadd.f32 %v125, 2.0
  %v146 = vadd.f32 %v127, 2.0
  %v147 = vadd.f32 %v129, 2.0
  %v148 = vadd.f32 %v131, 2.0
  %v149 = vadd.f32 %v133, 2.0
  %v150 = vmul.f32 %v103, %v134
  %v151 = vmul.f32 %v105, %v135
  %v152 = vmul.f32 %v107, %v136
  %v153 = vmul.f32 %v109, %v137
  %v154 = vmul.f32 %v111, %v138
  %v155 = vmul.f32 %v113, %v139
  %v156 = vmul.f32 %v115, %v140
  %v157 = vmul.f32 %v117, %v141
  %v158 = vmul.f32 %v119, %v142
  %v159 = vmul.f32 %v121, %v143
  %v160 = vmul.f32 %v123, %v144
  %v161 = vmul.f32 %v125, %v145
  %v162 = vmul.f32 %v127, %v146
  %v163 = vmul.f32 %v129, %v147
  %v164 = vmul.f32 %v131, %v148
  %v165 = vmul.f32 %v133, %v149
  %v166 = vadd.f32 %v150, 2.0
  %v167 = vadd.f32 %v151, 2.0
  %v168 = vadd.f32 %v152, 2.0
  %v169 = vadd.f32 %v153, 2.0
  %v170 = vadd.f32 %v154, 2.0
  %v171 = vadd.f32 %v155, 2.0
  %v172 = vadd.f32 %v156, 2.0
  %v173 = vadd.f32 %v157, 2.0
  %v174 = vadd.f32 %v158, 2.0
  %v175 = vadd.f32 %v159, 2.0
  %v176 = vadd.f32 %v160, 2.0
  %v177 = vadd.f32 %v161, 2.0
  %v178 = vadd.f32 %v162, 2.0
  %v179 = vadd.f32 %v163, 2.0
  %v180 = vadd.f32 %v164, 2.0
  %v181 = vadd.f32 %v165, 2.0
  %v182 = vrcp.pop %v166
  %v183 = vrcp.pop %v167
  %v184 = vrcp.pop %v168
  %v185 = vrcp.pop %v169
  %v186 = vrcp.pop %v170
  %v187 = vrcp.pop %v171
  %v188 = vrcp.pop %v172
  %v189 = vrcp.pop %v173
  %v190 = vrcp.pop %v174
  %v191 = vrcp.pop %v175
  %v192 = vrcp.pop %v176
  %v193 = vrcp.pop %v177
  %v194 = vrcp.pop %v178
  %v195 = vrcp.pop %v179
  %v196 = vrcp.pop %v180
  %v197 = vrcp.pop %v181
  %v198 = vmul.f32 %v150, %v182
  %v199 = vmul.f32 %v151, %v183
  %v200 = vmul.f32 %v152, %v184
  %v201 = vmul.f32 %v153, %v185
  %v202 = vmul.f32 %v154, %v186
  %v203 = vmul.f32 %v155, %v187
  %v204 = vmul.f32 %v156, %v188
  %v205 = vmul.f32 %v157, %v189
  %v206 = vmul.f32 %v158, %v190
  %v207 = vmul.f32 %v159, %v191
  %v208 = vmul.f32 %v160, %v192
  %v209 = vmul.f32 %v161, %v193
  %v210 = vmul.f32 %v162, %v194
  %v211 = vmul.f32 %v163, %v195
  %v212 = vmul.f32 %v164, %v196
  %v213 = vmul.f32 %v165, %v197
  %v214 = vmul.f32 %v70, %v198
  %v215 = vmul.f32 %v71, %v199
  %v216 = vmul.f32 %v72, %v200
  %v217 = vmul.f32 %v73, %v201
  %v218 = vmul.f32 %v74, %v202
  %v219 = vmul.f32 %v75, %v203
  %v220 = vmul.f32 %v76, %v204
  %v221 = vmul.f32 %v77, %v205
  %v222 = vmul.f32 %v78, %v206
  %v223 = vmul.f32 %v79, %v207
  %v224 = vmul.f32 %v80, %v208
  %v225 = vmul.f32 %v81, %v209
  %v226 = vmul.f32 %v82, %v210
  %v227 = vmul.f32 %v83, %v211
  %v228 = vmul.f32 %v84, %v212
  %v229 = vmul.f32 %v85, %v213
  %v230 = vpack.c.bf16 %v214, %v214
  %v231 = vpack.c.bf16 %v215, %v215
  %v232 = vpack.c.bf16 %v216, %v216
  %v233 = vpack.c.bf16 %v217, %v217
  %v234 = vpack.c.bf16 %v218, %v218
  %v235 = vpack.c.bf16 %v219, %v219
  %v236 = vpack.c.bf16 %v220, %v220
  %v237 = vpack.c.bf16 %v221, %v221
  %v238 = vpack.c.bf16 %v222, %v222
  %v239 = vpack.c.bf16 %v223, %v223
  %v240 = vpack.c.bf16 %v224, %v224
  %v241 = vpack.c.bf16 %v225, %v225
  %v242 = vpack.c.bf16 %v226, %v226
  %v243 = vpack.c.bf16 %v227, %v227
  %v244 = vpack.c.bf16 %v228, %v228
  %v245 = vpack.c.bf16 %v229, %v229
  %246 = vst [vmem:[%s3] sm:$0xf] %v230
  %247 = vst [vmem:[%s3 + $0x4] sm:$0xf] %v231
  %248 = vst [vmem:[%s3 + $0x8] sm:$0xf] %v232
  %249 = vst [vmem:[%s3 + $0xc] sm:$0xf] %v233
  %250 = vst [vmem:[%s3 + $0x10] sm:$0xf] %v234
  %251 = vst [vmem:[%s3 + $0x14] sm:$0xf] %v235
  %252 = vst [vmem:[%s3 + $0x18] sm:$0xf] %v236
  %253 = vst [vmem:[%s3 + $0x1c] sm:$0xf] %v237
  %254 = vst [vmem:[%s3 + $0x20] sm:$0xf] %v238
  %255 = vst [vmem:[%s3 + $0x24] sm:$0xf] %v239
  %256 = vst [vmem:[%s3 + $0x28] sm:$0xf] %v240
  %257 = vst [vmem:[%s3 + $0x2c] sm:$0xf] %v241
  %258 = vst [vmem:[%s3 + $0x30] sm:$0xf] %v242
  %259 = vst [vmem:[%s3 + $0x34] sm:$0xf] %v243
  %260 = vst [vmem:[%s3 + $0x38] sm:$0xf] %v244
  %261 = vst [vmem:[%s3 + $0x3c] sm:$0xf] %v245
  // Predicated region
  $region14: #{stage2_forward.11} parent=0 // pred_check
    _
  $region15: #{stage2_forward.11} parent=0 // pred_check_branch
    %263 = sbr.rel (0) target = $region17
  $region16: #{stage2_forward.11} parent=0 // pred_region
    _
  $region17: #{stage2_forward.11} parent=0 // pred_fallthru
    _
  // Predicated region
  $region18: #{stage2_forward.11} parent=0 // pred_check
    _
  $region19: #{stage2_forward.11} parent=0 // pred_check_branch
    %265 = sbr.rel (0) target = $region21
  $region20: #{stage2_forward.11} parent=0 // pred_region
    _
  $region21: #{stage2_forward.11} parent=0 // pred_fallthru
    _

// kernel: stage2_forward.12
$region0: #{stage2_forward.12}
  #allocation0 [shape = 'u32[]', space=smem, size = 0x4, offset = 0x4, fixed_abs, tag = 'smem constant byte address 0x4 - core index']
  #allocation1 [shape = 'u32[72,128]{1,0:T(1,128)}', space=vmem, size = 0x9000, scoped, tag = 'internal scratch']
  %s0 = inlined_call_operand.vmem [shape: bf16[128,128], index: 0, kind: input, shape index: {}]
  %s1 = inlined_call_operand.vmem [shape: bf16[128,128], index: 1, kind: input, shape index: {}]
  %s2 = inlined_call_operand.vmem [shape: bf16[128,128], index: 2, kind: output, shape index: {0}]
  %s3 = inlined_call_operand.vmem [shape: f32[1,1,128], index: 3, kind: output, shape index: {1}]
  %s4 = inlined_call_operand.vmem [shape: f32[1,1,128], index: 4, kind: output, shape index: {2}]
  %5 = xla_tuple %s2, %s3, %s4
  %s6 = sld [smem:[#allocation0]]
  $region34: #{stage2_forward.12} parent=0
    _
  %s8 = ssub.s32 1, %s6
  %s9 = scalar_select 0, %s8, %s6
  // Predicated region
  $region2: #{stage2_forward.12} parent=0 // pred_check
    _
  $region3: #{stage2_forward.12} parent=0 // pred_check_branch
    %11 = sbr.rel (0) target = $region5
  $region4: #{stage2_forward.12} parent=0 // pred_region
    _
  $region5: #{stage2_forward.12} parent=0 // pred_fallthru
    _
  // Predicated region
  $region6: #{stage2_forward.12} parent=0 // pred_check
    _
  $region7: #{stage2_forward.12} parent=0 // pred_check_branch
    %13 = sbr.rel (0) target = $region9
  $region8: #{stage2_forward.12} parent=0 // pred_region
    _
  $region9: #{stage2_forward.12} parent=0 // pred_fallthru
    _
  %v14 = vld [vmem:[%s0] sm:$0xf]
  %v15 = vld [vmem:[%s0 + $0x4] sm:$0xf]
  %v16 = vld [vmem:[%s0 + $0x8] sm:$0xf]
  %v17 = vld [vmem:[%s0 + $0xc] sm:$0xf]
  %v18 = vld [vmem:[%s0 + $0x10] sm:$0xf]
  %v19 = vld [vmem:[%s0 + $0x14] sm:$0xf]
  %v20 = vld [vmem:[%s0 + $0x18] sm:$0xf]
  %v21 = vld [vmem:[%s0 + $0x1c] sm:$0xf]
  %v22 = vld [vmem:[%s0 + $0x20] sm:$0xf]
  %v23 = vld [vmem:[%s0 + $0x24] sm:$0xf]
  %v24 = vld [vmem:[%s0 + $0x28] sm:$0xf]
  %v25 = vld [vmem:[%s0 + $0x2c] sm:$0xf]
  %v26 = vld [vmem:[%s0 + $0x30] sm:$0xf]
  %v27 = vld [vmem:[%s0 + $0x34] sm:$0xf]
  %v28 = vld [vmem:[%s0 + $0x38] sm:$0xf]
  %v29 = vld [vmem:[%s0 + $0x3c] sm:$0xf]
  %v30 = vld [vmem:[%s1] sm:$0xf]
  %v31 = vld [vmem:[%s1 + $0x4] sm:$0xf]
  %v32 = vld [vmem:[%s1 + $0x8] sm:$0xf]
  %v33 = vld [vmem:[%s1 + $0xc] sm:$0xf]
  %v34 = vld [vmem:[%s1 + $0x10] sm:$0xf]
  %v35 = vld [vmem:[%s1 + $0x14] sm:$0xf]
  %v36 = vld [vmem:[%s1 + $0x18] sm:$0xf]
  %v37 = vld [vmem:[%s1 + $0x1c] sm:$0xf]
  %v38 = vld [vmem:[%s1 + $0x20] sm:$0xf]
  %v39 = vld [vmem:[%s1 + $0x24] sm:$0xf]
  %v40 = vld [vmem:[%s1 + $0x28] sm:$0xf]
  %v41 = vld [vmem:[%s1 + $0x2c] sm:$0xf]
  %v42 = vld [vmem:[%s1 + $0x30] sm:$0xf]
  %v43 = vld [vmem:[%s1 + $0x34] sm:$0xf]
  %v44 = vld [vmem:[%s1 + $0x38] sm:$0xf]
  %v45 = vld [vmem:[%s1 + $0x3c] sm:$0xf]
  %v62 = vunpack.c.l.b16 %v14
  %v63 = vunpack.c.l.b16 %v15
  %v64 = vunpack.c.l.b16 %v16
  %v65 = vunpack.c.l.b16 %v17
  %v66 = vunpack.c.l.b16 %v18
  %v67 = vunpack.c.l.b16 %v19
  %v68 = vunpack.c.l.b16 %v20
  %v69 = vunpack.c.l.b16 %v21
  %v70 = vunpack.c.l.b16 %v22
  %v71 = vunpack.c.l.b16 %v23
  %v72 = vunpack.c.l.b16 %v24
  %v73 = vunpack.c.l.b16 %v25
  %v74 = vunpack.c.l.b16 %v26
  %v75 = vunpack.c.l.b16 %v27
  %v76 = vunpack.c.l.b16 %v28
  %v77 = vunpack.c.l.b16 %v29
  %v78 = vpack.c.b16 %v63, %v62
  %v79 = vpack.c.b16 %v65, %v64
  %v80 = vpack.c.b16 %v67, %v66
  %v81 = vpack.c.b16 %v69, %v68
  %v82 = vpack.c.b16 %v71, %v70
  %v83 = vpack.c.b16 %v73, %v72
  %v84 = vpack.c.b16 %v75, %v74
  %v85 = vpack.c.b16 %v77, %v76
  %v110 = vunpack.c.l.b16 %v30
  %v111 = vunpack.c.l.b16 %v31
  %v112 = vunpack.c.l.b16 %v32
  %v113 = vunpack.c.l.b16 %v33
  %v114 = vunpack.c.l.b16 %v34
  %v115 = vunpack.c.l.b16 %v35
  %v116 = vunpack.c.l.b16 %v36
  %v117 = vunpack.c.l.b16 %v37
  %v118 = vunpack.c.l.b16 %v38
  %v119 = vunpack.c.l.b16 %v39
  %v120 = vunpack.c.l.b16 %v40
  %v121 = vunpack.c.l.b16 %v41
  %v122 = vunpack.c.l.b16 %v42
  %v123 = vunpack.c.l.b16 %v43
  %v124 = vunpack.c.l.b16 %v44
  %v125 = vunpack.c.l.b16 %v45
  %v126 = vpack.c.b16 %v111, %v110
  %v127 = vpack.c.b16 %v113, %v112
  %v128 = vpack.c.b16 %v115, %v114
  %v129 = vpack.c.b16 %v117, %v116
  %v130 = vpack.c.b16 %v119, %v118
  %v131 = vpack.c.b16 %v121, %v120
  %v132 = vpack.c.b16 %v123, %v122
  %v133 = vpack.c.b16 %v125, %v124
  %142 = vmatpush.bf16.msra.mxu0 %v133
  %143 = vmatpush.bf16.msra.mxu0 %v132
  %144 = vmatpush.bf16.msra.mxu0 %v131
  %145 = vmatpush.bf16.msra.mxu0 %v130
  %146 = vmatpush.bf16.msra.mxu0 %v129
  %147 = vmatpush.bf16.msra.mxu0 %v128
  %148 = vmatpush.bf16.msra.mxu0 %v127
  %149 = vmatpush.bf16.msra.mxu0 %v126
  %150 = vmatmul.bf16.gmra.mxu0 %v78
  %v151 = vpop.f32.mrf.mxu0
  %v152 = vadd.f32 0.0, %v151
  %v153 = vpop.f32.mrf.mxu0
  %v154 = vadd.f32 0.0, %v153
  %155 = vmatmul.bf16.gmra.mxu0 %v79
  %v156 = vpop.f32.mrf.mxu0
  %v157 = vadd.f32 0.0, %v156
  %v158 = vpop.f32.mrf.mxu0
  %v159 = vadd.f32 0.0, %v158
  %160 = vmatmul.bf16.gmra.mxu0 %v80
  %v161 = vpop.f32.mrf.mxu0
  %v162 = vadd.f32 0.0, %v161
  %v163 = vpop.f32.mrf.mxu0
  %v164 = vadd.f32 0.0, %v163
  %165 = vmatmul.bf16.gmra.mxu0 %v81
  %v166 = vpop.f32.mrf.mxu0
  %v167 = vadd.f32 0.0, %v166
  %v168 = vpop.f32.mrf.mxu0
  %v169 = vadd.f32 0.0, %v168
  %170 = vmatmul.bf16.gmra.mxu0 %v82
  %v171 = vpop.f32.mrf.mxu0
  %v172 = vadd.f32 0.0, %v171
  %v173 = vpop.f32.mrf.mxu0
  %v174 = vadd.f32 0.0, %v173
  %175 = vmatmul.bf16.gmra.mxu0 %v83
  %v176 = vpop.f32.mrf.mxu0
  %v177 = vadd.f32 0.0, %v176
  %v178 = vpop.f32.mrf.mxu0
  %v179 = vadd.f32 0.0, %v178
  %180 = vmatmul.bf16.gmra.mxu0 %v84
  %v181 = vpop.f32.mrf.mxu0
  %v182 = vadd.f32 0.0, %v181
  %v183 = vpop.f32.mrf.mxu0
  %v184 = vadd.f32 0.0, %v183
  %185 = vmatmul.bf16.gmra.mxu0 %v85
  %v186 = vpop.f32.mrf.mxu0
  %v187 = vadd.f32 0.0, %v186
  %v188 = vpop.f32.mrf.mxu0
  %v189 = vadd.f32 0.0, %v188
  %190 = vdwg.mxu0
  %v191 = vpack.c.bf16 %v152, %v152
  %v192 = vpack.c.bf16 %v154, %v154
  %v193 = vpack.c.bf16 %v157, %v157
  %v194 = vpack.c.bf16 %v159, %v159
  %v195 = vpack.c.bf16 %v162, %v162
  %v196 = vpack.c.bf16 %v164, %v164
  %v197 = vpack.c.bf16 %v167, %v167
  %v198 = vpack.c.bf16 %v169, %v169
  %v199 = vpack.c.bf16 %v172, %v172
  %v200 = vpack.c.bf16 %v174, %v174
  %v201 = vpack.c.bf16 %v177, %v177
  %v202 = vpack.c.bf16 %v179, %v179
  %v203 = vpack.c.bf16 %v182, %v182
  %v204 = vpack.c.bf16 %v184, %v184
  %v205 = vpack.c.bf16 %v187, %v187
  %v206 = vpack.c.bf16 %v189, %v189
  %207 = vst [vmem:[%s2] sm:$0xf] %v191
  %208 = vst [vmem:[%s2 + $0x4] sm:$0xf] %v192
  %209 = vst [vmem:[%s2 + $0x8] sm:$0xf] %v193
  %210 = vst [vmem:[%s2 + $0xc] sm:$0xf] %v194
  %211 = vst [vmem:[%s2 + $0x10] sm:$0xf] %v195
  %212 = vst [vmem:[%s2 + $0x14] sm:$0xf] %v196
  %213 = vst [vmem:[%s2 + $0x18] sm:$0xf] %v197
  %214 = vst [vmem:[%s2 + $0x1c] sm:$0xf] %v198
  %215 = vst [vmem:[%s2 + $0x20] sm:$0xf] %v199
  %216 = vst [vmem:[%s2 + $0x24] sm:$0xf] %v200
  %217 = vst [vmem:[%s2 + $0x28] sm:$0xf] %v201
  %218 = vst [vmem:[%s2 + $0x2c] sm:$0xf] %v202
  %219 = vst [vmem:[%s2 + $0x30] sm:$0xf] %v203
  %220 = vst [vmem:[%s2 + $0x34] sm:$0xf] %v204
  %221 = vst [vmem:[%s2 + $0x38] sm:$0xf] %v205
  %222 = vst [vmem:[%s2 + $0x3c] sm:$0xf] %v206
  %s223 = smul.u32 0, 128
  %s224 = ssub.s32 128, %s223
  %v225 = vlaneseq
  %v226 = vshrl.u32 %v225, 7
  %v227 = vadd.s32 %v226, 8
  %v228 = vadd.s32 %v226, 16
  %v229 = vadd.s32 %v226, 24
  %v230 = vadd.s32 %v226, 32
  %v231 = vadd.s32 %v226, 40
  %v232 = vadd.s32 %v226, 48
  %v233 = vadd.s32 %v226, 56
  %v234 = vadd.s32 %v226, 64
  %v235 = vadd.s32 %v226, 72
  %v236 = vadd.s32 %v226, 80
  %v237 = vadd.s32 %v226, 88
  %v238 = vadd.s32 %v226, 96
  %v239 = vadd.s32 %v226, 104
  %v240 = vadd.s32 %v226, 112
  %v241 = vadd.s32 %v226, 120
  %v242 = vstv %s224
  %vm243 = vcmp.lt.s32.totalorder %v226, %v242
  %vm244 = vcmp.lt.s32.totalorder %v227, %v242
  %vm245 = vcmp.lt.s32.totalorder %v228, %v242
  %vm246 = vcmp.lt.s32.totalorder %v229, %v242
  %vm247 = vcmp.lt.s32.totalorder %v230, %v242
  %vm248 = vcmp.lt.s32.totalorder %v231, %v242
  %vm249 = vcmp.lt.s32.totalorder %v232, %v242
  %vm250 = vcmp.lt.s32.totalorder %v233, %v242
  %vm251 = vcmp.lt.s32.totalorder %v234, %v242
  %vm252 = vcmp.lt.s32.totalorder %v235, %v242
  %vm253 = vcmp.lt.s32.totalorder %v236, %v242
  %vm254 = vcmp.lt.s32.totalorder %v237, %v242
  %vm255 = vcmp.lt.s32.totalorder %v238, %v242
  %vm256 = vcmp.lt.s32.totalorder %v239, %v242
  %vm257 = vcmp.lt.s32.totalorder %v240, %v242
  %vm258 = vcmp.lt.s32.totalorder %v241, %v242
  %v259 = vsel %vm243, %v152, 0.0
  %v260 = vsel %vm244, %v154, 0.0
  %v261 = vsel %vm245, %v157, 0.0
  %v262 = vsel %vm246, %v159, 0.0
  %v263 = vsel %vm247, %v162, 0.0
  %v264 = vsel %vm248, %v164, 0.0
  %v265 = vsel %vm249, %v167, 0.0
  %v266 = vsel %vm250, %v169, 0.0
  %v267 = vsel %vm251, %v172, 0.0
  %v268 = vsel %vm252, %v174, 0.0
  %v269 = vsel %vm253, %v177, 0.0
  %v270 = vsel %vm254, %v179, 0.0
  %v271 = vsel %vm255, %v182, 0.0
  %v272 = vsel %vm256, %v184, 0.0
  %v273 = vsel %vm257, %v187, 0.0
  %v274 = vsel %vm258, %v189, 0.0
  %v275 = vadd.f32 %v259, %v260
  %v276 = vadd.f32 %v275, %v261
  %v277 = vadd.f32 %v276, %v262
  %v278 = vadd.f32 %v277, %v263
  %v279 = vadd.f32 %v278, %v264
  %v280 = vadd.f32 %v279, %v265
  %v281 = vadd.f32 %v280, %v266
  %v282 = vadd.f32 %v281, %v267
  %v283 = vadd.f32 %v282, %v268
  %v284 = vadd.f32 %v283, %v269
  %v285 = vadd.f32 %v284, %v270
  %v286 = vadd.f32 %v285, %v271
  %v287 = vadd.f32 %v286, %v272
  %v288 = vadd.f32 %v287, %v273
  %v289 = vadd.f32 %v288, %v274
  %v290 = vrot.slane %v289, 4
  %v291 = vadd.f32 %v289, %v290
  %v292 = vrot.slane %v291, 2
  %v293 = vadd.f32 %v291, %v292
  %v294 = vrot.slane %v293, 1
  %v295 = vadd.f32 %v293, %v294
  %296 = vst [vmem:[%s3] sm:$0x1] %v295
  %v297 = vmul.f32 %v259, %v259
  %v298 = vmul.f32 %v260, %v260
  %v299 = vmul.f32 %v261, %v261
  %v300 = vmul.f32 %v262, %v262
  %v301 = vmul.f32 %v263, %v263
  %v302 = vmul.f32 %v264, %v264
  %v303 = vmul.f32 %v265, %v265
  %v304 = vmul.f32 %v266, %v266
  %v305 = vmul.f32 %v267, %v267
  %v306 = vmul.f32 %v268, %v268
  %v307 = vmul.f32 %v269, %v269
  %v308 = vmul.f32 %v270, %v270
  %v309 = vmul.f32 %v271, %v271
  %v310 = vmul.f32 %v272, %v272
  %v311 = vmul.f32 %v273, %v273
  %v312 = vmul.f32 %v274, %v274
  %v313 = vadd.f32 %v297, %v298
  %v314 = vadd.f32 %v313, %v299
  %v315 = vadd.f32 %v314, %v300
  %v316 = vadd.f32 %v315, %v301
  %v317 = vadd.f32 %v316, %v302
  %v318 = vadd.f32 %v317, %v303
  %v319 = vadd.f32 %v318, %v304
  %v320 = vadd.f32 %v319, %v305
  %v321 = vadd.f32 %v320, %v306
  %v322 = vadd.f32 %v321, %v307
  %v323 = vadd.f32 %v322, %v308
  %v324 = vadd.f32 %v323, %v309
  %v325 = vadd.f32 %v324, %v310
  %v326 = vadd.f32 %v325, %v311
  %v327 = vadd.f32 %v326, %v312
  %v328 = vrot.slane %v327, 4
  %v329 = vadd.f32 %v327, %v328
  %v330 = vrot.slane %v329, 2
  %v331 = vadd.f32 %v329, %v330
  %v332 = vrot.slane %v331, 1
  %v333 = vadd.f32 %v331, %v332
  %334 = vst [vmem:[%s4] sm:$0x1] %v333
  // Predicated region
  $region10: #{stage2_forward.12} parent=0 // pred_check
    _
  $region11: #{stage2_forward.12} parent=0 // pred_check_branch
    %336 = sbr.rel (0) target = $region13
  $region12: #{stage2_forward.12} parent=0 // pred_region
    _
  $region13: #{stage2_forward.12} parent=0 // pred_fallthru
    _
  // Predicated region
  $region14: #{stage2_forward.12} parent=0 // pred_check
    _
  $region15: #{stage2_forward.12} parent=0 // pred_check_branch
    %338 = sbr.rel (0) target = $region17
  $region16: #{stage2_forward.12} parent=0 // pred_region
    _
  $region17: #{stage2_forward.12} parent=0 // pred_fallthru
    _
  // Predicated region
  $region18: #{stage2_forward.12} parent=0 // pred_check
    _
  $region19: #{stage2_forward.12} parent=0 // pred_check_branch
    %340 = sbr.rel (0) target = $region21
  $region20: #{stage2_forward.12} parent=0 // pred_region
    _
  $region21: #{stage2_forward.12} parent=0 // pred_fallthru
    _
  // Predicated region
  $region22: #{stage2_forward.12} parent=0 // pred_check
    _
  $region23: #{stage2_forward.12} parent=0 // pred_check_branch
    %342 = sbr.rel (0) target = $region25
  $region24: #{stage2_forward.12} parent=0 // pred_region
    _
  $region25: #{stage2_forward.12} parent=0 // pred_fallthru
    _
  // Predicated region
  $region26: #{stage2_forward.12} parent=0 // pred_check
    _
  $region27: #{stage2_forward.12} parent=0 // pred_check_branch
    %344 = sbr.rel (0) target = $region29
  $region28: #{stage2_forward.12} parent=0 // pred_region
    _
  $region29: #{stage2_forward.12} parent=0 // pred_fallthru
    _
  // Predicated region
  $region30: #{stage2_forward.12} parent=0 // pred_check
    _
  $region31: #{stage2_forward.12} parent=0 // pred_check_branch
    %346 = sbr.rel (0) target = $region33
  $region32: #{stage2_forward.12} parent=0 // pred_region
    _
  $region33: #{stage2_forward.12} parent=0 // pred_fallthru
    _

// kernel: stage2_forward.17
$region0: #{stage2_forward.17}
  #allocation0 [shape = 'u32[]', space=smem, size = 0x4, offset = 0x4, fixed_abs, tag = 'smem constant byte address 0x4 - core index']
  #allocation1 [shape = 'u32[72,128]{1,0:T(1,128)}', space=vmem, size = 0x9000, scoped, tag = 'internal scratch']
  %s0 = inlined_call_operand.vmem [shape: bf16[128,128], index: 0, kind: input, shape index: {}]
  %s1 = inlined_call_operand.vmem [shape: f32[1,128], index: 1, kind: input, shape index: {}]
  %s2 = inlined_call_operand.vmem [shape: f32[1,128], index: 2, kind: input, shape index: {}]
  %s3 = inlined_call_operand.vmem [shape: bf16[128,128], index: 3, kind: input, shape index: {}]
  %s4 = inlined_call_operand.vmem [shape: bf16[128,128], index: 4, kind: output, shape index: {}]
  %s5 = sld [smem:[#allocation0]]
  $region26: #{stage2_forward.17} parent=0
    _
  %s7 = ssub.s32 1, %s5
  %s8 = scalar_select 0, %s7, %s5
  // Predicated region
  $region2: #{stage2_forward.17} parent=0 // pred_check
    _
  $region3: #{stage2_forward.17} parent=0 // pred_check_branch
    %10 = sbr.rel (0) target = $region5
  $region4: #{stage2_forward.17} parent=0 // pred_region
    _
  $region5: #{stage2_forward.17} parent=0 // pred_fallthru
    _
  // Predicated region
  $region6: #{stage2_forward.17} parent=0 // pred_check
    _
  $region7: #{stage2_forward.17} parent=0 // pred_check_branch
    %12 = sbr.rel (0) target = $region9
  $region8: #{stage2_forward.17} parent=0 // pred_region
    _
  $region9: #{stage2_forward.17} parent=0 // pred_fallthru
    _
  // Predicated region
  $region10: #{stage2_forward.17} parent=0 // pred_check
    _
  $region11: #{stage2_forward.17} parent=0 // pred_check_branch
    %14 = sbr.rel (0) target = $region13
  $region12: #{stage2_forward.17} parent=0 // pred_region
    _
  $region13: #{stage2_forward.17} parent=0 // pred_fallthru
    _
  // Predicated region
  $region14: #{stage2_forward.17} parent=0 // pred_check
    _
  $region15: #{stage2_forward.17} parent=0 // pred_check_branch
    %16 = sbr.rel (0) target = $region17
  $region16: #{stage2_forward.17} parent=0 // pred_region
    _
  $region17: #{stage2_forward.17} parent=0 // pred_fallthru
    _
  %v17 = vld [vmem:[%s0] sm:$0xf]
  %v18 = vld [vmem:[%s0 + $0x4] sm:$0xf]
  %v19 = vld [vmem:[%s0 + $0x8] sm:$0xf]
  %v20 = vld [vmem:[%s0 + $0xc] sm:$0xf]
  %v21 = vld [vmem:[%s0 + $0x10] sm:$0xf]
  %v22 = vld [vmem:[%s0 + $0x14] sm:$0xf]
  %v23 = vld [vmem:[%s0 + $0x18] sm:$0xf]
  %v24 = vld [vmem:[%s0 + $0x1c] sm:$0xf]
  %v25 = vld [vmem:[%s0 + $0x20] sm:$0xf]
  %v26 = vld [vmem:[%s0 + $0x24] sm:$0xf]
  %v27 = vld [vmem:[%s0 + $0x28] sm:$0xf]
  %v28 = vld [vmem:[%s0 + $0x2c] sm:$0xf]
  %v29 = vld [vmem:[%s0 + $0x30] sm:$0xf]
  %v30 = vld [vmem:[%s0 + $0x34] sm:$0xf]
  %v31 = vld [vmem:[%s0 + $0x38] sm:$0xf]
  %v32 = vld [vmem:[%s0 + $0x3c] sm:$0xf]
  %v33 = vunpack.c.l.bf16 %v17
  %v34 = vunpack.c.l.bf16 %v18
  %v35 = vunpack.c.l.bf16 %v19
  %v36 = vunpack.c.l.bf16 %v20
  %v37 = vunpack.c.l.bf16 %v21
  %v38 = vunpack.c.l.bf16 %v22
  %v39 = vunpack.c.l.bf16 %v23
  %v40 = vunpack.c.l.bf16 %v24
  %v41 = vunpack.c.l.bf16 %v25
  %v42 = vunpack.c.l.bf16 %v26
  %v43 = vunpack.c.l.bf16 %v27
  %v44 = vunpack.c.l.bf16 %v28
  %v45 = vunpack.c.l.bf16 %v29
  %v46 = vunpack.c.l.bf16 %v30
  %v47 = vunpack.c.l.bf16 %v31
  %v48 = vunpack.c.l.bf16 %v32
  %v49 = vld [vmem:[%s1] sm:$0x1]
  %v51 = vperm.slane %v49, 0
  %v53 = vmul.f32 %v33, %v51
  %v54 = vmul.f32 %v34, %v51
  %v55 = vmul.f32 %v35, %v51
  %v56 = vmul.f32 %v36, %v51
  %v57 = vmul.f32 %v37, %v51
  %v58 = vmul.f32 %v38, %v51
  %v59 = vmul.f32 %v39, %v51
  %v60 = vmul.f32 %v40, %v51
  %v61 = vmul.f32 %v41, %v51
  %v62 = vmul.f32 %v42, %v51
  %v63 = vmul.f32 %v43, %v51
  %v64 = vmul.f32 %v44, %v51
  %v65 = vmul.f32 %v45, %v51
  %v66 = vmul.f32 %v46, %v51
  %v67 = vmul.f32 %v47, %v51
  %v68 = vmul.f32 %v48, %v51
  %v69 = vld [vmem:[%s2] sm:$0x1]
  %v71 = vperm.slane %v69, 0
  %v73 = vadd.f32 %v53, %v71
  %v74 = vadd.f32 %v54, %v71
  %v75 = vadd.f32 %v55, %v71
  %v76 = vadd.f32 %v56, %v71
  %v77 = vadd.f32 %v57, %v71
  %v78 = vadd.f32 %v58, %v71
  %v79 = vadd.f32 %v59, %v71
  %v80 = vadd.f32 %v60, %v71
  %v81 = vadd.f32 %v61, %v71
  %v82 = vadd.f32 %v62, %v71
  %v83 = vadd.f32 %v63, %v71
  %v84 = vadd.f32 %v64, %v71
  %v85 = vadd.f32 %v65, %v71
  %v86 = vadd.f32 %v66, %v71
  %v87 = vadd.f32 %v67, %v71
  %v88 = vadd.f32 %v68, %v71
  %v89 = vmin.f32 %v73, 20.0
  %v90 = vmin.f32 %v74, 20.0
  %v91 = vmin.f32 %v75, 20.0
  %v92 = vmin.f32 %v76, 20.0
  %v93 = vmin.f32 %v77, 20.0
  %v94 = vmin.f32 %v78, 20.0
  %v95 = vmin.f32 %v79, 20.0
  %v96 = vmin.f32 %v80, 20.0
  %v97 = vmin.f32 %v81, 20.0
  %v98 = vmin.f32 %v82, 20.0
  %v99 = vmin.f32 %v83, 20.0
  %v100 = vmin.f32 %v84, 20.0
  %v101 = vmin.f32 %v85, 20.0
  %v102 = vmin.f32 %v86, 20.0
  %v103 = vmin.f32 %v87, 20.0
  %v104 = vmin.f32 %v88, 20.0
  %v105 = vmul.f32 %v89, 1.442695
  %v106 = vpow.pop %v105
  %v107 = vmul.f32 %v90, 1.442695
  %v108 = vpow.pop %v107
  %v109 = vmul.f32 %v91, 1.442695
  %v110 = vpow.pop %v109
  %v111 = vmul.f32 %v92, 1.442695
  %v112 = vpow.pop %v111
  %v113 = vmul.f32 %v93, 1.442695
  %v114 = vpow.pop %v113
  %v115 = vmul.f32 %v94, 1.442695
  %v116 = vpow.pop %v115
  %v117 = vmul.f32 %v95, 1.442695
  %v118 = vpow.pop %v117
  %v119 = vmul.f32 %v96, 1.442695
  %v120 = vpow.pop %v119
  %v121 = vmul.f32 %v97, 1.442695
  %v122 = vpow.pop %v121
  %v123 = vmul.f32 %v98, 1.442695
  %v124 = vpow.pop %v123
  %v125 = vmul.f32 %v99, 1.442695
  %v126 = vpow.pop %v125
  %v127 = vmul.f32 %v100, 1.442695
  %v128 = vpow.pop %v127
  %v129 = vmul.f32 %v101, 1.442695
  %v130 = vpow.pop %v129
  %v131 = vmul.f32 %v102, 1.442695
  %v132 = vpow.pop %v131
  %v133 = vmul.f32 %v103, 1.442695
  %v134 = vpow.pop %v133
  %v135 = vmul.f32 %v104, 1.442695
  %v136 = vpow.pop %v135
  %v137 = vadd.f32 %v106, 2.0
  %v138 = vadd.f32 %v108, 2.0
  %v139 = vadd.f32 %v110, 2.0
  %v140 = vadd.f32 %v112, 2.0
  %v141 = vadd.f32 %v114, 2.0
  %v142 = vadd.f32 %v116, 2.0
  %v143 = vadd.f32 %v118, 2.0
  %v144 = vadd.f32 %v120, 2.0
  %v145 = vadd.f32 %v122, 2.0
  %v146 = vadd.f32 %v124, 2.0
  %v147 = vadd.f32 %v126, 2.0
  %v148 = vadd.f32 %v128, 2.0
  %v149 = vadd.f32 %v130, 2.0
  %v150 = vadd.f32 %v132, 2.0
  %v151 = vadd.f32 %v134, 2.0
  %v152 = vadd.f32 %v136, 2.0
  %v153 = vmul.f32 %v106, %v137
  %v154 = vmul.f32 %v108, %v138
  %v155 = vmul.f32 %v110, %v139
  %v156 = vmul.f32 %v112, %v140
  %v157 = vmul.f32 %v114, %v141
  %v158 = vmul.f32 %v116, %v142
  %v159 = vmul.f32 %v118, %v143
  %v160 = vmul.f32 %v120, %v144
  %v161 = vmul.f32 %v122, %v145
  %v162 = vmul.f32 %v124, %v146
  %v163 = vmul.f32 %v126, %v147
  %v164 = vmul.f32 %v128, %v148
  %v165 = vmul.f32 %v130, %v149
  %v166 = vmul.f32 %v132, %v150
  %v167 = vmul.f32 %v134, %v151
  %v168 = vmul.f32 %v136, %v152
  %v169 = vadd.f32 %v153, 2.0
  %v170 = vadd.f32 %v154, 2.0
  %v171 = vadd.f32 %v155, 2.0
  %v172 = vadd.f32 %v156, 2.0
  %v173 = vadd.f32 %v157, 2.0
  %v174 = vadd.f32 %v158, 2.0
  %v175 = vadd.f32 %v159, 2.0
  %v176 = vadd.f32 %v160, 2.0
  %v177 = vadd.f32 %v161, 2.0
  %v178 = vadd.f32 %v162, 2.0
  %v179 = vadd.f32 %v163, 2.0
  %v180 = vadd.f32 %v164, 2.0
  %v181 = vadd.f32 %v165, 2.0
  %v182 = vadd.f32 %v166, 2.0
  %v183 = vadd.f32 %v167, 2.0
  %v184 = vadd.f32 %v168, 2.0
  %v185 = vrcp.pop %v169
  %v186 = vrcp.pop %v170
  %v187 = vrcp.pop %v171
  %v188 = vrcp.pop %v172
  %v189 = vrcp.pop %v173
  %v190 = vrcp.pop %v174
  %v191 = vrcp.pop %v175
  %v192 = vrcp.pop %v176
  %v193 = vrcp.pop %v177
  %v194 = vrcp.pop %v178
  %v195 = vrcp.pop %v179
  %v196 = vrcp.pop %v180
  %v197 = vrcp.pop %v181
  %v198 = vrcp.pop %v182
  %v199 = vrcp.pop %v183
  %v200 = vrcp.pop %v184
  %v201 = vmul.f32 %v153, %v185
  %v202 = vmul.f32 %v154, %v186
  %v203 = vmul.f32 %v155, %v187
  %v204 = vmul.f32 %v156, %v188
  %v205 = vmul.f32 %v157, %v189
  %v206 = vmul.f32 %v158, %v190
  %v207 = vmul.f32 %v159, %v191
  %v208 = vmul.f32 %v160, %v192
  %v209 = vmul.f32 %v161, %v193
  %v210 = vmul.f32 %v162, %v194
  %v211 = vmul.f32 %v163, %v195
  %v212 = vmul.f32 %v164, %v196
  %v213 = vmul.f32 %v165, %v197
  %v214 = vmul.f32 %v166, %v198
  %v215 = vmul.f32 %v167, %v199
  %v216 = vmul.f32 %v168, %v200
  %v217 = vmul.f32 %v73, %v201
  %v218 = vmul.f32 %v74, %v202
  %v219 = vmul.f32 %v75, %v203
  %v220 = vmul.f32 %v76, %v204
  %v221 = vmul.f32 %v77, %v205
  %v222 = vmul.f32 %v78, %v206
  %v223 = vmul.f32 %v79, %v207
  %v224 = vmul.f32 %v80, %v208
  %v225 = vmul.f32 %v81, %v209
  %v226 = vmul.f32 %v82, %v210
  %v227 = vmul.f32 %v83, %v211
  %v228 = vmul.f32 %v84, %v212
  %v229 = vmul.f32 %v85, %v213
  %v230 = vmul.f32 %v86, %v214
  %v231 = vmul.f32 %v87, %v215
  %v232 = vmul.f32 %v88, %v216
  %v233 = vld [vmem:[%s3] sm:$0xf]
  %v234 = vld [vmem:[%s3 + $0x4] sm:$0xf]
  %v235 = vld [vmem:[%s3 + $0x8] sm:$0xf]
  %v236 = vld [vmem:[%s3 + $0xc] sm:$0xf]
  %v237 = vld [vmem:[%s3 + $0x10] sm:$0xf]
  %v238 = vld [vmem:[%s3 + $0x14] sm:$0xf]
  %v239 = vld [vmem:[%s3 + $0x18] sm:$0xf]
  %v240 = vld [vmem:[%s3 + $0x1c] sm:$0xf]
  %v241 = vld [vmem:[%s3 + $0x20] sm:$0xf]
  %v242 = vld [vmem:[%s3 + $0x24] sm:$0xf]
  %v243 = vld [vmem:[%s3 + $0x28] sm:$0xf]
  %v244 = vld [vmem:[%s3 + $0x2c] sm:$0xf]
  %v245 = vld [vmem:[%s3 + $0x30] sm:$0xf]
  %v246 = vld [vmem:[%s3 + $0x34] sm:$0xf]
  %v247 = vld [vmem:[%s3 + $0x38] sm:$0xf]
  %v248 = vld [vmem:[%s3 + $0x3c] sm:$0xf]
  %v249 = vunpack.c.l.bf16 %v233
  %v250 = vunpack.c.l.bf16 %v234
  %v251 = vunpack.c.l.bf16 %v235
  %v252 = vunpack.c.l.bf16 %v236
  %v253 = vunpack.c.l.bf16 %v237
  %v254 = vunpack.c.l.bf16 %v238
  %v255 = vunpack.c.l.bf16 %v239
  %v256 = vunpack.c.l.bf16 %v240
  %v257 = vunpack.c.l.bf16 %v241
  %v258 = vunpack.c.l.bf16 %v242
  %v259 = vunpack.c.l.bf16 %v243
  %v260 = vunpack.c.l.bf16 %v244
  %v261 = vunpack.c.l.bf16 %v245
  %v262 = vunpack.c.l.bf16 %v246
  %v263 = vunpack.c.l.bf16 %v247
  %v264 = vunpack.c.l.bf16 %v248
  %v265 = vadd.f32 %v217, %v249
  %v266 = vadd.f32 %v218, %v250
  %v267 = vadd.f32 %v219, %v251
  %v268 = vadd.f32 %v220, %v252
  %v269 = vadd.f32 %v221, %v253
  %v270 = vadd.f32 %v222, %v254
  %v271 = vadd.f32 %v223, %v255
  %v272 = vadd.f32 %v224, %v256
  %v273 = vadd.f32 %v225, %v257
  %v274 = vadd.f32 %v226, %v258
  %v275 = vadd.f32 %v227, %v259
  %v276 = vadd.f32 %v228, %v260
  %v277 = vadd.f32 %v229, %v261
  %v278 = vadd.f32 %v230, %v262
  %v279 = vadd.f32 %v231, %v263
  %v280 = vadd.f32 %v232, %v264
  %v281 = vpack.c.bf16 %v265, %v265
  %v282 = vpack.c.bf16 %v266, %v266
  %v283 = vpack.c.bf16 %v267, %v267
  %v284 = vpack.c.bf16 %v268, %v268
  %v285 = vpack.c.bf16 %v269, %v269
  %v286 = vpack.c.bf16 %v270, %v270
  %v287 = vpack.c.bf16 %v271, %v271
  %v288 = vpack.c.bf16 %v272, %v272
  %v289 = vpack.c.bf16 %v273, %v273
  %v290 = vpack.c.bf16 %v274, %v274
  %v291 = vpack.c.bf16 %v275, %v275
  %v292 = vpack.c.bf16 %v276, %v276
  %v293 = vpack.c.bf16 %v277, %v277
  %v294 = vpack.c.bf16 %v278, %v278
  %v295 = vpack.c.bf16 %v279, %v279
  %v296 = vpack.c.bf16 %v280, %v280
  %297 = vst [vmem:[%s4] sm:$0xf] %v281
  %298 = vst [vmem:[%s4 + $0x4] sm:$0xf] %v282
  %299 = vst [vmem:[%s4 + $0x8] sm:$0xf] %v283
  %300 = vst [vmem:[%s4 + $0xc] sm:$0xf] %v284
  %301 = vst [vmem:[%s4 + $0x10] sm:$0xf] %v285
  %302 = vst [vmem:[%s4 + $0x14] sm:$0xf] %v286
  %303 = vst [vmem:[%s4 + $0x18] sm:$0xf] %v287
  %304 = vst [vmem:[%s4 + $0x1c] sm:$0xf] %v288
  %305 = vst [vmem:[%s4 + $0x20] sm:$0xf] %v289
  %306 = vst [vmem:[%s4 + $0x24] sm:$0xf] %v290
  %307 = vst [vmem:[%s4 + $0x28] sm:$0xf] %v291
  %308 = vst [vmem:[%s4 + $0x2c] sm:$0xf] %v292
  %309 = vst [vmem:[%s4 + $0x30] sm:$0xf] %v293
  %310 = vst [vmem:[%s4 + $0x34] sm:$0xf] %v294
  %311 = vst [vmem:[%s4 + $0x38] sm:$0xf] %v295
  %312 = vst [vmem:[%s4 + $0x3c] sm:$0xf] %v296
  // Predicated region
  $region18: #{stage2_forward.17} parent=0 // pred_check
    _
  $region19: #{stage2_forward.17} parent=0 // pred_check_branch
    %314 = sbr.rel (0) target = $region21
  $region20: #{stage2_forward.17} parent=0 // pred_region
    _
  $region21: #{stage2_forward.17} parent=0 // pred_fallthru
    _
  // Predicated region
  $region22: #{stage2_forward.17} parent=0 // pred_check
    _
  $region23: #{stage2_forward.17} parent=0 // pred_check_branch
    %316 = sbr.rel (0) target = $region25
  $region24: #{stage2_forward.17} parent=0 // pred_region
    _
  $region25: #{stage2_forward.17} parent=0 // pred_fallthru
    _

</llo_original>
